<compile_context>
chip_gen: v5e
topology: v5e:2x2
jax: 0.10.0
libtpu: 0.0.40
codegen_flags: <defaults>
</compile_context>

<pallas_src>
import functools

import jax
import jax.numpy as jnp
import numpy as np
from jax.experimental import pallas as pl
from jax.experimental.pallas import tpu as pltpu

# ----------------------- hyper-parameters (small) ---------------------------
PATCH_SIZE    = 4
EXPANSION     = 2
NUM_LAYERS    = 2
N_FFT         = 4
WINDOW_LENGTH = 16           # seq_length
BATCH         = 2
NUM_CHANNELS  = 1            # the reference forward's .view() requires C == 1

PROJ_SIZE    = PATCH_SIZE * 2 * (N_FFT // 2 + 1)   # 24
HIDDEN       = EXPANSION * PROJ_SIZE               # 48
PATCH_NUM    = WINDOW_LENGTH // PATCH_SIZE         # 4
TOKEN_HIDDEN = 2 * PATCH_NUM                       # 8
CHAN_HIDDEN  = 2 * HIDDEN                          # 96

SLAB_LANES = 128             # lane width of the packed parameter slab


# ------------------------- packed-parameter layout ---------------------------
def _make_layout():
    """Static (row_offset, rows, cols) for every parameter inside the slab.

    Every block starts at lane 0 and at a sublane offset that is a multiple of
    8, so in-kernel static slices never cross / shift (8,128) tiles."""
    entries = [("wp", (PROJ_SIZE, HIDDEN)), ("bp", (1, HIDDEN)),
               ("wcls", (1, HIDDEN)), ("bcls", (1, 1))]
    for l in range(NUM_LAYERS):
        entries += [
            (f"ln1g{l}", (1, HIDDEN)), (f"ln1b{l}", (1, HIDDEN)),
            (f"wt1t{l}", (TOKEN_HIDDEN, PATCH_NUM)),   # stored transposed
            (f"bt1{l}",  (TOKEN_HIDDEN, 1)),           # stored as a column
            (f"wt2t{l}", (PATCH_NUM, TOKEN_HIDDEN)),   # stored transposed
            (f"bt2{l}",  (PATCH_NUM, 1)),              # stored as a column
            (f"ln2g{l}", (1, HIDDEN)), (f"ln2b{l}", (1, HIDDEN)),
            (f"wc1{l}", (HIDDEN, CHAN_HIDDEN)), (f"bc1{l}", (1, CHAN_HIDDEN)),
            (f"wc2{l}", (CHAN_HIDDEN, HIDDEN)), (f"bc2{l}", (1, HIDDEN)),
        ]
    layout, off = {}, 0
    for name, (r, c) in entries:
        layout[name] = (off, r, c)
        off += -(-r // 8) * 8                          # round rows up to 8
    return layout, off


_LAYOUT, _TOTAL_ROWS = _make_layout()                  # 496 rows x 128 lanes


# ----------------------------- kernel helpers --------------------------------
def _selu(x):
    alpha = 1.6732632423543772
    scale = 1.0507009873554805
    return scale * jnp.where(x > 0, x, alpha * (jnp.exp(x) - 1.0))


def _gelu(x):
    # tanh approximation (activation inside the encoder; exact form of the
    # undefined PatchMixerEncoder is not specified)
    c = 0.7978845608028654
    return 0.5 * x * (1.0 + jnp.tanh(c * (x + 0.044715 * x * x * x)))


def _layernorm(x, g, b, eps=1e-5):
    mu = jnp.mean(x, axis=-1, keepdims=True)
    var = jnp.mean((x - mu) ** 2, axis=-1, keepdims=True)
    return (x - mu) * jax.lax.rsqrt(var + eps) * g + b


# ------------------------------ Pallas kernel --------------------------------
def patch_mixer_kernel(feat_ref, lab_ref, slab_ref, loss_ref):
    """feat_ref: (B*P, PROJ_SIZE), lab_ref: (B*P, PATCH_SIZE),
    slab_ref: (_TOTAL_ROWS, 128) packed params, loss_ref: (1, 1)."""

    def prm(name):
        off, r, c = _LAYOUT[name]
        return slab_ref[off:off + r, 0:c]              # static slice, one load

    # ---- proj (Linear(proj_size, hidden)) + SELU -----------------------------
    x = feat_ref[...]                                                  # (BP, D)
    h = jnp.dot(x, prm("wp"), preferred_element_type=jnp.float32) + prm("bp")
    h = _selu(h)                                                       # (BP, H)

    # ---- PatchMixer encoder ---------------------------------------------------
    # TODO(synk): PatchMixerEncoder / PatchDetectorConfig are external and not
    # provided; implemented here as standard MLP-Mixer blocks (LN -> patch-mix
    # MLP -> residual; LN -> feature-mix MLP -> residual) with d_model=hidden.
    for l in range(NUM_LAYERS):
        # load this layer's params once (unrolled loop -> no duplicated loads)
        ln1g, ln1b = prm(f"ln1g{l}"), prm(f"ln1b{l}")
        wt1t, bt1 = prm(f"wt1t{l}"), prm(f"bt1{l}")    # (Q,P), (Q,1)
        wt2t, bt2 = prm(f"wt2t{l}"), prm(f"bt2{l}")    # (P,Q), (P,1)
        ln2g, ln2b = prm(f"ln2g{l}"), prm(f"ln2b{l}")
        wc1, bc1 = prm(f"wc1{l}"), prm(f"bc1{l}")
        wc2, bc2 = prm(f"wc2{l}"), prm(f"bc2{l}")

        # -- token (patch) mixing: contract the patch axis with unrolled VPU
        #    FMAs, keeping H=48 in the lane dimension (no swapaxes/transposes).
        y = _layernorm(h, ln1g, ln1b)                                  # (BP, H)
        blocks = []
        for b in range(BATCH):
            yb = y[b * PATCH_NUM:(b + 1) * PATCH_NUM, :]               # (P, H)
            # u[q, :] = sum_p wt1[p, q] * yb[p, :]
            acc = wt1t[:, 0:1] * yb[0:1, :]
            for p in range(1, PATCH_NUM):
                acc = acc + wt1t[:, p:p + 1] * yb[p:p + 1, :]          # (Q, H)
            u = _gelu(acc + bt1)
            # v[p, :] = sum_q wt2[q, p] * u[q, :]
            acc2 = wt2t[:, 0:1] * u[0:1, :]
            for q in range(1, TOKEN_HIDDEN):
                acc2 = acc2 + wt2t[:, q:q + 1] * u[q:q + 1, :]         # (P, H)
            blocks.append(acc2 + bt2)
        h = h + jnp.concatenate(blocks, axis=0)                        # (BP, H)

        # -- channel (feature) mixing: plain lane-dense MXU matmuls.
        y = _layernorm(h, ln2g, ln2b)                                  # (BP, H)
        y = _gelu(jnp.dot(y, wc1, preferred_element_type=jnp.float32) + bc1)
        y = jnp.dot(y, wc2, preferred_element_type=jnp.float32) + bc2
        h = h + y

    # ---- classifier (Linear(hidden, 1)) as broadcast-mul + lane reduce --------
    z = jnp.sum(h * prm("wcls"), axis=-1, keepdims=True) + prm("bcls")  # (BP, 1)

    # ---- patch labels: sum over patch -> (>0) ---------------------------------
    lab = lab_ref[...]                                                  # (BP, p)
    y_lab = (jnp.sum(lab, axis=-1, keepdims=True) > 0.0).astype(jnp.float32)

    # ---- BCEWithLogitsLoss (mean reduction), stable form ----------------------
    terms = (jnp.maximum(z, 0.0) - z * y_lab
             + jnp.log(1.0 + jnp.exp(-jnp.abs(z))))
    loss_ref[...] = jnp.mean(terms, keepdims=True)


# ------------------------------- JAX glue -------------------------------------
def time_to_timefreq(x2d, n_fft):
    """torch.stft(x, n_fft, hop=n_fft//4, rectangular window, center=True,
    pad_mode='reflect', onesided=True) then view_as_real, flattening the
    (freq, real/imag) axes into the feature axis (real/imag interleaved per
    frequency bin — layout choice, the reference helper is not provided).
    x2d: (rows, L) -> (rows, n_frames, 2*(n_fft//2+1)).  Negligible preproc."""
    hop = max(n_fft // 4, 1)
    rows, L = x2d.shape
    pad = n_fft // 2
    xp = jnp.pad(x2d, ((0, 0), (pad, pad)), mode="reflect")
    n_frames = (L + 2 * pad - n_fft) // hop + 1
    frames = jnp.stack([xp[:, t * hop:t * hop + n_fft] for t in range(n_frames)],
                       axis=1)                                  # (rows, T, n_fft)
    k = jnp.arange(n_fft // 2 + 1, dtype=jnp.float32)[:, None]
    n = jnp.arange(n_fft, dtype=jnp.float32)[None, :]
    ang = 2.0 * jnp.pi * k * n / n_fft
    re = jnp.einsum("rtn,kn->rtk", frames, jnp.cos(ang))
    im = jnp.einsum("rtn,kn->rtk", frames, -jnp.sin(ang))
    return jnp.stack([re, im], axis=-1).reshape(rows, n_frames, -1)


def pack_param_slab(params):
    """Pack all parameters into one (rows, 128) f32 slab (single VMEM DMA)."""
    slab = np.zeros((_TOTAL_ROWS, SLAB_LANES), np.float32)

    def put(name, arr):
        off, r, c = _LAYOUT[name]
        slab[off:off + r, 0:c] = np.asarray(arr, np.float32).reshape(r, c)

    put("wp", params["wp"]); put("bp", params["bp"])
    put("wcls", params["wcls"]); put("bcls", params["bcls"])
    for l in range(NUM_LAYERS):
        put(f"ln1g{l}", params["ln1g"][l]); put(f"ln1b{l}", params["ln1b"][l])
        put(f"wt1t{l}", np.asarray(params["wt1"][l]).T)          # (Q, P)
        put(f"bt1{l}", np.asarray(params["bt1"][l]).reshape(-1, 1))
        put(f"wt2t{l}", np.asarray(params["wt2"][l]).T)          # (P, Q)
        put(f"bt2{l}", np.asarray(params["bt2"][l]).reshape(-1, 1))
        put(f"ln2g{l}", params["ln2g"][l]); put(f"ln2b{l}", params["ln2b"][l])
        put(f"wc1{l}", params["wc1"][l]); put(f"bc1{l}", params["bc1"][l])
        put(f"wc2{l}", params["wc2"][l]); put(f"bc2{l}", params["bc2"][l])
    return jnp.asarray(slab)


def _full_spec(shape):
    nd = len(shape)
    return pl.BlockSpec(shape, lambda i, _nd=nd: (0,) * _nd)


def patch_classify_mixer_loss(x, params):
    """Forward pass of PatchClassifyMixer using the deterministic `original`
    distortion (the if_finetune=True branch).  Returns the scalar BCE loss."""
    B, L, C = x.shape
    assert C == 1, "the reference forward's .view() requires num_channels == 1"
    # TODO(synk): uniform_distort / scale_distort / jitering_distort /
    # mirror_flip are external & undefined; only `original` (identity signal,
    # all-zero labels) is implemented, matching the if_finetune=True branch.
    x_distorted, labels = x, jnp.zeros((B, L), jnp.float32)

    x2d = jnp.transpose(x_distorted, (0, 2, 1)).reshape(B * C, L)
    freq = time_to_timefreq(x2d, N_FFT)[:, :L, :]               # (B, L, 6)
    feat2d = freq.reshape(B * PATCH_NUM, PROJ_SIZE).astype(jnp.float32)
    lab2d = labels.reshape(B * PATCH_NUM, PATCH_SIZE)           # unfold, step==size

    slab = pack_param_slab(params)

    args = [feat2d, lab2d, slab]
    # NOTE: at this problem size (B*P = 8 rows) a single grid step is optimal.
    # For realistic batches, add a "parallel" row-block grid axis (multiples of
    # 8 rows, >=128 per step), emit per-block partial sums and finish the mean
    # in the wrapper so v7x's second TensorCore gets work.
    loss = pl.pallas_call(
        patch_mixer_kernel,
        out_shape=jax.ShapeDtypeStruct((1, 1), jnp.float32),
        grid=(1,),
        in_specs=[_full_spec(a.shape) for a in args],
        out_specs=_full_spec((1, 1)),
        compiler_params=pltpu.CompilerParams(
            dimension_semantics=("arbitrary",)),
    )(*args)
    return loss[0, 0]


def init_params(key):
    keys = jax.random.split(key, 6)

    def xavier(k, shape):
        fan_in, fan_out = shape[-2], shape[-1]
        bound = float(np.sqrt(6.0 / (fan_in + fan_out)))
        return jax.random.uniform(k, shape, jnp.float32, -bound, bound)

    return dict(
        wp=xavier(keys[0], (PROJ_SIZE, HIDDEN)),
        bp=jnp.zeros((1, HIDDEN), jnp.float32),
        ln1g=jnp.ones((NUM_LAYERS, 1, HIDDEN), jnp.float32),
        ln1b=jnp.zeros((NUM_LAYERS, 1, HIDDEN), jnp.float32),
        wt1=xavier(keys[1], (NUM_LAYERS, PATCH_NUM, TOKEN_HIDDEN)),
        bt1=jnp.zeros((NUM_LAYERS, 1, TOKEN_HIDDEN), jnp.float32),
        wt2=xavier(keys[2], (NUM_LAYERS, TOKEN_HIDDEN, PATCH_NUM)),
        bt2=jnp.zeros((NUM_LAYERS, 1, PATCH_NUM), jnp.float32),
        ln2g=jnp.ones((NUM_LAYERS, 1, HIDDEN), jnp.float32),
        ln2b=jnp.zeros((NUM_LAYERS, 1, HIDDEN), jnp.float32),
        wc1=xavier(keys[3], (NUM_LAYERS, HIDDEN, CHAN_HIDDEN)),
        bc1=jnp.zeros((NUM_LAYERS, 1, CHAN_HIDDEN), jnp.float32),
        wc2=xavier(keys[4], (NUM_LAYERS, CHAN_HIDDEN, HIDDEN)),
        bc2=jnp.zeros((NUM_LAYERS, 1, HIDDEN), jnp.float32),
        wcls=xavier(keys[5], (1, HIDDEN)),
        bcls=jnp.zeros((1, 1), jnp.float32),
    )


if __name__ == "__main__":
    key = jax.random.PRNGKey(0)
    kx, kp = jax.random.split(key)
    x = jax.random.normal(kx, (BATCH, WINDOW_LENGTH, NUM_CHANNELS), jnp.float32)
    params = init_params(kp)

    loss = patch_classify_mixer_loss(x, params)
    loss = jax.block_until_ready(loss)
    assert np.isfinite(np.asarray(loss)), "loss is not finite"
    print("KERNEL_OK")
</pallas_src>

<mosaic_0001>
module attributes {stable_mosaic.version = 11 : i64} {
  func.func @patch_mixer_kernel(%arg0: i32, %arg1: memref<8x24xf32, #tpu.memory_space<vmem>>, %arg2: memref<8x4xf32, #tpu.memory_space<vmem>>, %arg3: memref<496x128xf32, #tpu.memory_space<vmem>>, %arg4: memref<1x1xf32, #tpu.memory_space<vmem>>) attributes {dimension_semantics = [#tpu.dimension_semantics<arbitrary>], iteration_bounds = array<i64: 1>, scalar_prefetch = 0 : i64, scratch_operands = 0 : i64, tpu.core_type = #tpu.core_type<tc>, window_params = [{pipeline_mode = #tpu.pipeline_mode<synchronous>, transform_indices = @transform_0, window_bounds = array<i64: 8, 24>}, {pipeline_mode = #tpu.pipeline_mode<synchronous>, transform_indices = @transform_1, window_bounds = array<i64: 8, 4>}, {pipeline_mode = #tpu.pipeline_mode<synchronous>, transform_indices = @transform_2, window_bounds = array<i64: 496, 128>}, {pipeline_mode = #tpu.pipeline_mode<synchronous>, transform_indices = @transform_3, window_bounds = array<i64: 1, 1>}]} {
    %c0 = arith.constant 0 : index
    %c0_0 = arith.constant 0 : index
    %0 = vector.load %arg1[%c0, %c0_0] : memref<8x24xf32, #tpu.memory_space<vmem>>, vector<8x24xf32>
    %c0_1 = arith.constant 0 : index
    %c0_2 = arith.constant 0 : index
    %1 = vector.load %arg3[%c0_1, %c0_2] : memref<496x128xf32, #tpu.memory_space<vmem>>, vector<24x48xf32>
    %cst = arith.constant dense<0.000000e+00> : vector<8x48xf32>
    %2 = tpu.matmul %0, %1, %cst {dimension_numbers = #tpu.dot_dimension_numbers<[1], [0], [0], [1], [0, 0, 1, 1], [], []>} : vector<8x24xf32>, vector<24x48xf32>, vector<8x48xf32> -> vector<8x48xf32>
    %c24 = arith.constant 24 : index
    %c0_3 = arith.constant 0 : index
    %3 = vector.load %arg3[%c24, %c0_3] : memref<496x128xf32, #tpu.memory_space<vmem>>, vector<1x48xf32>
    %4 = vector.broadcast %3 : vector<1x48xf32> to vector<8x48xf32>
    %5 = arith.addf %2, %4 : vector<8x48xf32>
    %cst_4 = arith.constant 0.000000e+00 : f32
    %6 = vector.broadcast %cst_4 : f32 to vector<8x48xf32>
    %7 = arith.cmpf ogt, %5, %6 : vector<8x48xf32>
    %8 = math.exp %5 : vector<8x48xf32>
    %cst_5 = arith.constant 1.000000e+00 : f32
    %9 = vector.broadcast %cst_5 : f32 to vector<8x48xf32>
    %10 = arith.subf %8, %9 : vector<8x48xf32>
    %cst_6 = arith.constant 1.67326319 : f32
    %11 = vector.broadcast %cst_6 : f32 to vector<8x48xf32>
    %12 = arith.mulf %11, %10 : vector<8x48xf32>
    %13 = arith.select %7, %5, %12 : vector<8x48xi1>, vector<8x48xf32>
    %cst_7 = arith.constant 1.05070102 : f32
    %14 = vector.broadcast %cst_7 : f32 to vector<8x48xf32>
    %15 = arith.mulf %14, %13 : vector<8x48xf32>
    %c48 = arith.constant 48 : index
    %c0_8 = arith.constant 0 : index
    %16 = vector.load %arg3[%c48, %c0_8] : memref<496x128xf32, #tpu.memory_space<vmem>>, vector<1x48xf32>
    %c56 = arith.constant 56 : index
    %c0_9 = arith.constant 0 : index
    %17 = vector.load %arg3[%c56, %c0_9] : memref<496x128xf32, #tpu.memory_space<vmem>>, vector<1x48xf32>
    %c64 = arith.constant 64 : index
    %c0_10 = arith.constant 0 : index
    %18 = vector.load %arg3[%c64, %c0_10] : memref<496x128xf32, #tpu.memory_space<vmem>>, vector<8x4xf32>
    %c72 = arith.constant 72 : index
    %c0_11 = arith.constant 0 : index
    %19 = vector.load %arg3[%c72, %c0_11] : memref<496x128xf32, #tpu.memory_space<vmem>>, vector<8x1xf32>
    %c80 = arith.constant 80 : index
    %c0_12 = arith.constant 0 : index
    %20 = vector.load %arg3[%c80, %c0_12] : memref<496x128xf32, #tpu.memory_space<vmem>>, vector<4x8xf32>
    %c88 = arith.constant 88 : index
    %c0_13 = arith.constant 0 : index
    %21 = vector.load %arg3[%c88, %c0_13] : memref<496x128xf32, #tpu.memory_space<vmem>>, vector<4x1xf32>
    %c96 = arith.constant 96 : index
    %c0_14 = arith.constant 0 : index
    %22 = vector.load %arg3[%c96, %c0_14] : memref<496x128xf32, #tpu.memory_space<vmem>>, vector<1x48xf32>
    %c104 = arith.constant 104 : index
    %c0_15 = arith.constant 0 : index
    %23 = vector.load %arg3[%c104, %c0_15] : memref<496x128xf32, #tpu.memory_space<vmem>>, vector<1x48xf32>
    %c112 = arith.constant 112 : index
    %c0_16 = arith.constant 0 : index
    %24 = vector.load %arg3[%c112, %c0_16] : memref<496x128xf32, #tpu.memory_space<vmem>>, vector<48x96xf32>
    %c160 = arith.constant 160 : index
    %c0_17 = arith.constant 0 : index
    %25 = vector.load %arg3[%c160, %c0_17] : memref<496x128xf32, #tpu.memory_space<vmem>>, vector<1x96xf32>
    %c168 = arith.constant 168 : index
    %c0_18 = arith.constant 0 : index
    %26 = vector.load %arg3[%c168, %c0_18] : memref<496x128xf32, #tpu.memory_space<vmem>>, vector<96x48xf32>
    %c264 = arith.constant 264 : index
    %c0_19 = arith.constant 0 : index
    %27 = vector.load %arg3[%c264, %c0_19] : memref<496x128xf32, #tpu.memory_space<vmem>>, vector<1x48xf32>
    %cst_20 = arith.constant dense<0.000000e+00> : vector<8xf32>
    %28 = vector.multi_reduction <add>, %15, %cst_20 [1] : vector<8x48xf32> to vector<8xf32>
    %29 = vector.shape_cast %28 : vector<8xf32> to vector<8x1xf32>
    %cst_21 = arith.constant 4.800000e+01 : f32
    %30 = vector.broadcast %cst_21 : f32 to vector<8x1xf32>
    %31 = arith.divf %29, %30 : vector<8x1xf32>
    %32 = vector.broadcast %31 : vector<8x1xf32> to vector<8x48xf32>
    %33 = arith.subf %15, %32 : vector<8x48xf32>
    %34 = arith.mulf %33, %33 : vector<8x48xf32>
    %cst_22 = arith.constant dense<0.000000e+00> : vector<8xf32>
    %35 = vector.multi_reduction <add>, %34, %cst_22 [1] : vector<8x48xf32> to vector<8xf32>
    %36 = vector.shape_cast %35 : vector<8xf32> to vector<8x1xf32>
    %cst_23 = arith.constant 4.800000e+01 : f32
    %37 = vector.broadcast %cst_23 : f32 to vector<8x1xf32>
    %38 = arith.divf %36, %37 : vector<8x1xf32>
    %39 = vector.broadcast %31 : vector<8x1xf32> to vector<8x48xf32>
    %40 = arith.subf %15, %39 : vector<8x48xf32>
    %cst_24 = arith.constant 9.99999974E-6 : f32
    %41 = vector.broadcast %cst_24 : f32 to vector<8x1xf32>
    %42 = arith.addf %38, %41 : vector<8x1xf32>
    %43 = math.rsqrt %42 : vector<8x1xf32>
    %44 = vector.broadcast %43 : vector<8x1xf32> to vector<8x48xf32>
    %45 = arith.mulf %40, %44 : vector<8x48xf32>
    %46 = vector.broadcast %16 : vector<1x48xf32> to vector<8x48xf32>
    %47 = arith.mulf %45, %46 : vector<8x48xf32>
    %48 = vector.broadcast %17 : vector<1x48xf32> to vector<8x48xf32>
    %49 = arith.addf %47, %48 : vector<8x48xf32>
    %50 = vector.extract_strided_slice %49 {offsets = [0, 0], sizes = [4, 48], strides = [1, 1]} : vector<8x48xf32> to vector<4x48xf32>
    %51 = vector.extract_strided_slice %18 {offsets = [0, 0], sizes = [8, 1], strides = [1, 1]} : vector<8x4xf32> to vector<8x1xf32>
    %52 = vector.extract_strided_slice %50 {offsets = [0, 0], sizes = [1, 48], strides = [1, 1]} : vector<4x48xf32> to vector<1x48xf32>
    %53 = vector.broadcast %51 : vector<8x1xf32> to vector<8x48xf32>
    %54 = vector.broadcast %52 : vector<1x48xf32> to vector<8x48xf32>
    %55 = arith.mulf %53, %54 : vector<8x48xf32>
    %56 = vector.extract_strided_slice %18 {offsets = [0, 1], sizes = [8, 1], strides = [1, 1]} : vector<8x4xf32> to vector<8x1xf32>
    %57 = vector.extract_strided_slice %50 {offsets = [1, 0], sizes = [1, 48], strides = [1, 1]} : vector<4x48xf32> to vector<1x48xf32>
    %58 = vector.broadcast %56 : vector<8x1xf32> to vector<8x48xf32>
    %59 = vector.broadcast %57 : vector<1x48xf32> to vector<8x48xf32>
    %60 = arith.mulf %58, %59 : vector<8x48xf32>
    %61 = arith.addf %55, %60 : vector<8x48xf32>
    %62 = vector.extract_strided_slice %18 {offsets = [0, 2], sizes = [8, 1], strides = [1, 1]} : vector<8x4xf32> to vector<8x1xf32>
    %63 = vector.extract_strided_slice %50 {offsets = [2, 0], sizes = [1, 48], strides = [1, 1]} : vector<4x48xf32> to vector<1x48xf32>
    %64 = vector.broadcast %62 : vector<8x1xf32> to vector<8x48xf32>
    %65 = vector.broadcast %63 : vector<1x48xf32> to vector<8x48xf32>
    %66 = arith.mulf %64, %65 : vector<8x48xf32>
    %67 = arith.addf %61, %66 : vector<8x48xf32>
    %68 = vector.extract_strided_slice %18 {offsets = [0, 3], sizes = [8, 1], strides = [1, 1]} : vector<8x4xf32> to vector<8x1xf32>
    %69 = vector.extract_strided_slice %50 {offsets = [3, 0], sizes = [1, 48], strides = [1, 1]} : vector<4x48xf32> to vector<1x48xf32>
    %70 = vector.broadcast %68 : vector<8x1xf32> to vector<8x48xf32>
    %71 = vector.broadcast %69 : vector<1x48xf32> to vector<8x48xf32>
    %72 = arith.mulf %70, %71 : vector<8x48xf32>
    %73 = arith.addf %67, %72 : vector<8x48xf32>
    %74 = vector.broadcast %19 : vector<8x1xf32> to vector<8x48xf32>
    %75 = arith.addf %73, %74 : vector<8x48xf32>
    %cst_25 = arith.constant 5.000000e-01 : f32
    %76 = vector.broadcast %cst_25 : f32 to vector<8x48xf32>
    %77 = arith.mulf %76, %75 : vector<8x48xf32>
    %cst_26 = arith.constant 4.471500e-02 : f32
    %78 = vector.broadcast %cst_26 : f32 to vector<8x48xf32>
    %79 = arith.mulf %78, %75 : vector<8x48xf32>
    %80 = arith.mulf %79, %75 : vector<8x48xf32>
    %81 = arith.mulf %80, %75 : vector<8x48xf32>
    %82 = arith.addf %75, %81 : vector<8x48xf32>
    %cst_27 = arith.constant 0.797884583 : f32
    %83 = vector.broadcast %cst_27 : f32 to vector<8x48xf32>
    %84 = arith.mulf %83, %82 : vector<8x48xf32>
    %85 = math.tanh %84 : vector<8x48xf32>
    %cst_28 = arith.constant 1.000000e+00 : f32
    %86 = vector.broadcast %cst_28 : f32 to vector<8x48xf32>
    %87 = arith.addf %86, %85 : vector<8x48xf32>
    %88 = arith.mulf %77, %87 : vector<8x48xf32>
    %89 = vector.extract_strided_slice %20 {offsets = [0, 0], sizes = [4, 1], strides = [1, 1]} : vector<4x8xf32> to vector<4x1xf32>
    %90 = vector.extract_strided_slice %88 {offsets = [0, 0], sizes = [1, 48], strides = [1, 1]} : vector<8x48xf32> to vector<1x48xf32>
    %91 = vector.broadcast %89 : vector<4x1xf32> to vector<4x48xf32>
    %92 = vector.broadcast %90 : vector<1x48xf32> to vector<4x48xf32>
    %93 = arith.mulf %91, %92 : vector<4x48xf32>
    %94 = vector.extract_strided_slice %20 {offsets = [0, 1], sizes = [4, 1], strides = [1, 1]} : vector<4x8xf32> to vector<4x1xf32>
    %95 = vector.extract_strided_slice %88 {offsets = [1, 0], sizes = [1, 48], strides = [1, 1]} : vector<8x48xf32> to vector<1x48xf32>
    %96 = vector.broadcast %94 : vector<4x1xf32> to vector<4x48xf32>
    %97 = vector.broadcast %95 : vector<1x48xf32> to vector<4x48xf32>
    %98 = arith.mulf %96, %97 : vector<4x48xf32>
    %99 = arith.addf %93, %98 : vector<4x48xf32>
    %100 = vector.extract_strided_slice %20 {offsets = [0, 2], sizes = [4, 1], strides = [1, 1]} : vector<4x8xf32> to vector<4x1xf32>
    %101 = vector.extract_strided_slice %88 {offsets = [2, 0], sizes = [1, 48], strides = [1, 1]} : vector<8x48xf32> to vector<1x48xf32>
    %102 = vector.broadcast %100 : vector<4x1xf32> to vector<4x48xf32>
    %103 = vector.broadcast %101 : vector<1x48xf32> to vector<4x48xf32>
    %104 = arith.mulf %102, %103 : vector<4x48xf32>
    %105 = arith.addf %99, %104 : vector<4x48xf32>
    %106 = vector.extract_strided_slice %20 {offsets = [0, 3], sizes = [4, 1], strides = [1, 1]} : vector<4x8xf32> to vector<4x1xf32>
    %107 = vector.extract_strided_slice %88 {offsets = [3, 0], sizes = [1, 48], strides = [1, 1]} : vector<8x48xf32> to vector<1x48xf32>
    %108 = vector.broadcast %106 : vector<4x1xf32> to vector<4x48xf32>
    %109 = vector.broadcast %107 : vector<1x48xf32> to vector<4x48xf32>
    %110 = arith.mulf %108, %109 : vector<4x48xf32>
    %111 = arith.addf %105, %110 : vector<4x48xf32>
    %112 = vector.extract_strided_slice %20 {offsets = [0, 4], sizes = [4, 1], strides = [1, 1]} : vector<4x8xf32> to vector<4x1xf32>
    %113 = vector.extract_strided_slice %88 {offsets = [4, 0], sizes = [1, 48], strides = [1, 1]} : vector<8x48xf32> to vector<1x48xf32>
    %114 = vector.broadcast %112 : vector<4x1xf32> to vector<4x48xf32>
    %115 = vector.broadcast %113 : vector<1x48xf32> to vector<4x48xf32>
    %116 = arith.mulf %114, %115 : vector<4x48xf32>
    %117 = arith.addf %111, %116 : vector<4x48xf32>
    %118 = vector.extract_strided_slice %20 {offsets = [0, 5], sizes = [4, 1], strides = [1, 1]} : vector<4x8xf32> to vector<4x1xf32>
    %119 = vector.extract_strided_slice %88 {offsets = [5, 0], sizes = [1, 48], strides = [1, 1]} : vector<8x48xf32> to vector<1x48xf32>
    %120 = vector.broadcast %118 : vector<4x1xf32> to vector<4x48xf32>
    %121 = vector.broadcast %119 : vector<1x48xf32> to vector<4x48xf32>
    %122 = arith.mulf %120, %121 : vector<4x48xf32>
    %123 = arith.addf %117, %122 : vector<4x48xf32>
    %124 = vector.extract_strided_slice %20 {offsets = [0, 6], sizes = [4, 1], strides = [1, 1]} : vector<4x8xf32> to vector<4x1xf32>
    %125 = vector.extract_strided_slice %88 {offsets = [6, 0], sizes = [1, 48], strides = [1, 1]} : vector<8x48xf32> to vector<1x48xf32>
    %126 = vector.broadcast %124 : vector<4x1xf32> to vector<4x48xf32>
    %127 = vector.broadcast %125 : vector<1x48xf32> to vector<4x48xf32>
    %128 = arith.mulf %126, %127 : vector<4x48xf32>
    %129 = arith.addf %123, %128 : vector<4x48xf32>
    %130 = vector.extract_strided_slice %20 {offsets = [0, 7], sizes = [4, 1], strides = [1, 1]} : vector<4x8xf32> to vector<4x1xf32>
    %131 = vector.extract_strided_slice %88 {offsets = [7, 0], sizes = [1, 48], strides = [1, 1]} : vector<8x48xf32> to vector<1x48xf32>
    %132 = vector.broadcast %130 : vector<4x1xf32> to vector<4x48xf32>
    %133 = vector.broadcast %131 : vector<1x48xf32> to vector<4x48xf32>
    %134 = arith.mulf %132, %133 : vector<4x48xf32>
    %135 = arith.addf %129, %134 : vector<4x48xf32>
    %136 = vector.broadcast %21 : vector<4x1xf32> to vector<4x48xf32>
    %137 = arith.addf %135, %136 : vector<4x48xf32>
    %138 = vector.extract_strided_slice %49 {offsets = [4, 0], sizes = [4, 48], strides = [1, 1]} : vector<8x48xf32> to vector<4x48xf32>
    %139 = vector.extract_strided_slice %18 {offsets = [0, 0], sizes = [8, 1], strides = [1, 1]} : vector<8x4xf32> to vector<8x1xf32>
    %140 = vector.extract_strided_slice %138 {offsets = [0, 0], sizes = [1, 48], strides = [1, 1]} : vector<4x48xf32> to vector<1x48xf32>
    %141 = vector.broadcast %139 : vector<8x1xf32> to vector<8x48xf32>
    %142 = vector.broadcast %140 : vector<1x48xf32> to vector<8x48xf32>
    %143 = arith.mulf %141, %142 : vector<8x48xf32>
    %144 = vector.extract_strided_slice %18 {offsets = [0, 1], sizes = [8, 1], strides = [1, 1]} : vector<8x4xf32> to vector<8x1xf32>
    %145 = vector.extract_strided_slice %138 {offsets = [1, 0], sizes = [1, 48], strides = [1, 1]} : vector<4x48xf32> to vector<1x48xf32>
    %146 = vector.broadcast %144 : vector<8x1xf32> to vector<8x48xf32>
    %147 = vector.broadcast %145 : vector<1x48xf32> to vector<8x48xf32>
    %148 = arith.mulf %146, %147 : vector<8x48xf32>
    %149 = arith.addf %143, %148 : vector<8x48xf32>
    %150 = vector.extract_strided_slice %18 {offsets = [0, 2], sizes = [8, 1], strides = [1, 1]} : vector<8x4xf32> to vector<8x1xf32>
    %151 = vector.extract_strided_slice %138 {offsets = [2, 0], sizes = [1, 48], strides = [1, 1]} : vector<4x48xf32> to vector<1x48xf32>
    %152 = vector.broadcast %150 : vector<8x1xf32> to vector<8x48xf32>
    %153 = vector.broadcast %151 : vector<1x48xf32> to vector<8x48xf32>
    %154 = arith.mulf %152, %153 : vector<8x48xf32>
    %155 = arith.addf %149, %154 : vector<8x48xf32>
    %156 = vector.extract_strided_slice %18 {offsets = [0, 3], sizes = [8, 1], strides = [1, 1]} : vector<8x4xf32> to vector<8x1xf32>
    %157 = vector.extract_strided_slice %138 {offsets = [3, 0], sizes = [1, 48], strides = [1, 1]} : vector<4x48xf32> to vector<1x48xf32>
    %158 = vector.broadcast %156 : vector<8x1xf32> to vector<8x48xf32>
    %159 = vector.broadcast %157 : vector<1x48xf32> to vector<8x48xf32>
    %160 = arith.mulf %158, %159 : vector<8x48xf32>
    %161 = arith.addf %155, %160 : vector<8x48xf32>
    %162 = vector.broadcast %19 : vector<8x1xf32> to vector<8x48xf32>
    %163 = arith.addf %161, %162 : vector<8x48xf32>
    %cst_29 = arith.constant 5.000000e-01 : f32
    %164 = vector.broadcast %cst_29 : f32 to vector<8x48xf32>
    %165 = arith.mulf %164, %163 : vector<8x48xf32>
    %cst_30 = arith.constant 4.471500e-02 : f32
    %166 = vector.broadcast %cst_30 : f32 to vector<8x48xf32>
    %167 = arith.mulf %166, %163 : vector<8x48xf32>
    %168 = arith.mulf %167, %163 : vector<8x48xf32>
    %169 = arith.mulf %168, %163 : vector<8x48xf32>
    %170 = arith.addf %163, %169 : vector<8x48xf32>
    %cst_31 = arith.constant 0.797884583 : f32
    %171 = vector.broadcast %cst_31 : f32 to vector<8x48xf32>
    %172 = arith.mulf %171, %170 : vector<8x48xf32>
    %173 = math.tanh %172 : vector<8x48xf32>
    %cst_32 = arith.constant 1.000000e+00 : f32
    %174 = vector.broadcast %cst_32 : f32 to vector<8x48xf32>
    %175 = arith.addf %174, %173 : vector<8x48xf32>
    %176 = arith.mulf %165, %175 : vector<8x48xf32>
    %177 = vector.extract_strided_slice %20 {offsets = [0, 0], sizes = [4, 1], strides = [1, 1]} : vector<4x8xf32> to vector<4x1xf32>
    %178 = vector.extract_strided_slice %176 {offsets = [0, 0], sizes = [1, 48], strides = [1, 1]} : vector<8x48xf32> to vector<1x48xf32>
    %179 = vector.broadcast %177 : vector<4x1xf32> to vector<4x48xf32>
    %180 = vector.broadcast %178 : vector<1x48xf32> to vector<4x48xf32>
    %181 = arith.mulf %179, %180 : vector<4x48xf32>
    %182 = vector.extract_strided_slice %20 {offsets = [0, 1], sizes = [4, 1], strides = [1, 1]} : vector<4x8xf32> to vector<4x1xf32>
    %183 = vector.extract_strided_slice %176 {offsets = [1, 0], sizes = [1, 48], strides = [1, 1]} : vector<8x48xf32> to vector<1x48xf32>
    %184 = vector.broadcast %182 : vector<4x1xf32> to vector<4x48xf32>
    %185 = vector.broadcast %183 : vector<1x48xf32> to vector<4x48xf32>
    %186 = arith.mulf %184, %185 : vector<4x48xf32>
    %187 = arith.addf %181, %186 : vector<4x48xf32>
    %188 = vector.extract_strided_slice %20 {offsets = [0, 2], sizes = [4, 1], strides = [1, 1]} : vector<4x8xf32> to vector<4x1xf32>
    %189 = vector.extract_strided_slice %176 {offsets = [2, 0], sizes = [1, 48], strides = [1, 1]} : vector<8x48xf32> to vector<1x48xf32>
    %190 = vector.broadcast %188 : vector<4x1xf32> to vector<4x48xf32>
    %191 = vector.broadcast %189 : vector<1x48xf32> to vector<4x48xf32>
    %192 = arith.mulf %190, %191 : vector<4x48xf32>
    %193 = arith.addf %187, %192 : vector<4x48xf32>
    %194 = vector.extract_strided_slice %20 {offsets = [0, 3], sizes = [4, 1], strides = [1, 1]} : vector<4x8xf32> to vector<4x1xf32>
    %195 = vector.extract_strided_slice %176 {offsets = [3, 0], sizes = [1, 48], strides = [1, 1]} : vector<8x48xf32> to vector<1x48xf32>
    %196 = vector.broadcast %194 : vector<4x1xf32> to vector<4x48xf32>
    %197 = vector.broadcast %195 : vector<1x48xf32> to vector<4x48xf32>
    %198 = arith.mulf %196, %197 : vector<4x48xf32>
    %199 = arith.addf %193, %198 : vector<4x48xf32>
    %200 = vector.extract_strided_slice %20 {offsets = [0, 4], sizes = [4, 1], strides = [1, 1]} : vector<4x8xf32> to vector<4x1xf32>
    %201 = vector.extract_strided_slice %176 {offsets = [4, 0], sizes = [1, 48], strides = [1, 1]} : vector<8x48xf32> to vector<1x48xf32>
    %202 = vector.broadcast %200 : vector<4x1xf32> to vector<4x48xf32>
    %203 = vector.broadcast %201 : vector<1x48xf32> to vector<4x48xf32>
    %204 = arith.mulf %202, %203 : vector<4x48xf32>
    %205 = arith.addf %199, %204 : vector<4x48xf32>
    %206 = vector.extract_strided_slice %20 {offsets = [0, 5], sizes = [4, 1], strides = [1, 1]} : vector<4x8xf32> to vector<4x1xf32>
    %207 = vector.extract_strided_slice %176 {offsets = [5, 0], sizes = [1, 48], strides = [1, 1]} : vector<8x48xf32> to vector<1x48xf32>
    %208 = vector.broadcast %206 : vector<4x1xf32> to vector<4x48xf32>
    %209 = vector.broadcast %207 : vector<1x48xf32> to vector<4x48xf32>
    %210 = arith.mulf %208, %209 : vector<4x48xf32>
    %211 = arith.addf %205, %210 : vector<4x48xf32>
    %212 = vector.extract_strided_slice %20 {offsets = [0, 6], sizes = [4, 1], strides = [1, 1]} : vector<4x8xf32> to vector<4x1xf32>
    %213 = vector.extract_strided_slice %176 {offsets = [6, 0], sizes = [1, 48], strides = [1, 1]} : vector<8x48xf32> to vector<1x48xf32>
    %214 = vector.broadcast %212 : vector<4x1xf32> to vector<4x48xf32>
    %215 = vector.broadcast %213 : vector<1x48xf32> to vector<4x48xf32>
    %216 = arith.mulf %214, %215 : vector<4x48xf32>
    %217 = arith.addf %211, %216 : vector<4x48xf32>
    %218 = vector.extract_strided_slice %20 {offsets = [0, 7], sizes = [4, 1], strides = [1, 1]} : vector<4x8xf32> to vector<4x1xf32>
    %219 = vector.extract_strided_slice %176 {offsets = [7, 0], sizes = [1, 48], strides = [1, 1]} : vector<8x48xf32> to vector<1x48xf32>
    %220 = vector.broadcast %218 : vector<4x1xf32> to vector<4x48xf32>
    %221 = vector.broadcast %219 : vector<1x48xf32> to vector<4x48xf32>
    %222 = arith.mulf %220, %221 : vector<4x48xf32>
    %223 = arith.addf %217, %222 : vector<4x48xf32>
    %224 = vector.broadcast %21 : vector<4x1xf32> to vector<4x48xf32>
    %225 = arith.addf %223, %224 : vector<4x48xf32>
    %226 = tpu.concatenate %137, %225 in 0 : vector<4x48xf32>, vector<4x48xf32> -> vector<8x48xf32>
    %227 = arith.addf %15, %226 : vector<8x48xf32>
    %cst_33 = arith.constant dense<0.000000e+00> : vector<8xf32>
    %228 = vector.multi_reduction <add>, %227, %cst_33 [1] : vector<8x48xf32> to vector<8xf32>
    %229 = vector.shape_cast %228 : vector<8xf32> to vector<8x1xf32>
    %cst_34 = arith.constant 4.800000e+01 : f32
    %230 = vector.broadcast %cst_34 : f32 to vector<8x1xf32>
    %231 = arith.divf %229, %230 : vector<8x1xf32>
    %232 = vector.broadcast %231 : vector<8x1xf32> to vector<8x48xf32>
    %233 = arith.subf %227, %232 : vector<8x48xf32>
    %234 = arith.mulf %233, %233 : vector<8x48xf32>
    %cst_35 = arith.constant dense<0.000000e+00> : vector<8xf32>
    %235 = vector.multi_reduction <add>, %234, %cst_35 [1] : vector<8x48xf32> to vector<8xf32>
    %236 = vector.shape_cast %235 : vector<8xf32> to vector<8x1xf32>
    %cst_36 = arith.constant 4.800000e+01 : f32
    %237 = vector.broadcast %cst_36 : f32 to vector<8x1xf32>
    %238 = arith.divf %236, %237 : vector<8x1xf32>
    %239 = vector.broadcast %231 : vector<8x1xf32> to vector<8x48xf32>
    %240 = arith.subf %227, %239 : vector<8x48xf32>
    %cst_37 = arith.constant 9.99999974E-6 : f32
    %241 = vector.broadcast %cst_37 : f32 to vector<8x1xf32>
    %242 = arith.addf %238, %241 : vector<8x1xf32>
    %243 = math.rsqrt %242 : vector<8x1xf32>
    %244 = vector.broadcast %243 : vector<8x1xf32> to vector<8x48xf32>
    %245 = arith.mulf %240, %244 : vector<8x48xf32>
    %246 = vector.broadcast %22 : vector<1x48xf32> to vector<8x48xf32>
    %247 = arith.mulf %245, %246 : vector<8x48xf32>
    %248 = vector.broadcast %23 : vector<1x48xf32> to vector<8x48xf32>
    %249 = arith.addf %247, %248 : vector<8x48xf32>
    %cst_38 = arith.constant dense<0.000000e+00> : vector<8x96xf32>
    %250 = tpu.matmul %249, %24, %cst_38 {dimension_numbers = #tpu.dot_dimension_numbers<[1], [0], [0], [1], [0, 0, 1, 1], [], []>} : vector<8x48xf32>, vector<48x96xf32>, vector<8x96xf32> -> vector<8x96xf32>
    %251 = vector.broadcast %25 : vector<1x96xf32> to vector<8x96xf32>
    %252 = arith.addf %250, %251 : vector<8x96xf32>
    %cst_39 = arith.constant 5.000000e-01 : f32
    %253 = vector.broadcast %cst_39 : f32 to vector<8x96xf32>
    %254 = arith.mulf %253, %252 : vector<8x96xf32>
    %cst_40 = arith.constant 4.471500e-02 : f32
    %255 = vector.broadcast %cst_40 : f32 to vector<8x96xf32>
    %256 = arith.mulf %255, %252 : vector<8x96xf32>
    %257 = arith.mulf %256, %252 : vector<8x96xf32>
    %258 = arith.mulf %257, %252 : vector<8x96xf32>
    %259 = arith.addf %252, %258 : vector<8x96xf32>
    %cst_41 = arith.constant 0.797884583 : f32
    %260 = vector.broadcast %cst_41 : f32 to vector<8x96xf32>
    %261 = arith.mulf %260, %259 : vector<8x96xf32>
    %262 = math.tanh %261 : vector<8x96xf32>
    %cst_42 = arith.constant 1.000000e+00 : f32
    %263 = vector.broadcast %cst_42 : f32 to vector<8x96xf32>
    %264 = arith.addf %263, %262 : vector<8x96xf32>
    %265 = arith.mulf %254, %264 : vector<8x96xf32>
    %cst_43 = arith.constant dense<0.000000e+00> : vector<8x48xf32>
    %266 = tpu.matmul %265, %26, %cst_43 {dimension_numbers = #tpu.dot_dimension_numbers<[1], [0], [0], [1], [0, 0, 1, 1], [], []>} : vector<8x96xf32>, vector<96x48xf32>, vector<8x48xf32> -> vector<8x48xf32>
    %267 = vector.broadcast %27 : vector<1x48xf32> to vector<8x48xf32>
    %268 = arith.addf %266, %267 : vector<8x48xf32>
    %269 = arith.addf %227, %268 : vector<8x48xf32>
    %c272 = arith.constant 272 : index
    %c0_44 = arith.constant 0 : index
    %270 = vector.load %arg3[%c272, %c0_44] : memref<496x128xf32, #tpu.memory_space<vmem>>, vector<1x48xf32>
    %c280 = arith.constant 280 : index
    %c0_45 = arith.constant 0 : index
    %271 = vector.load %arg3[%c280, %c0_45] : memref<496x128xf32, #tpu.memory_space<vmem>>, vector<1x48xf32>
    %c288 = arith.constant 288 : index
    %c0_46 = arith.constant 0 : index
    %272 = vector.load %arg3[%c288, %c0_46] : memref<496x128xf32, #tpu.memory_space<vmem>>, vector<8x4xf32>
    %c296 = arith.constant 296 : index
    %c0_47 = arith.constant 0 : index
    %273 = vector.load %arg3[%c296, %c0_47] : memref<496x128xf32, #tpu.memory_space<vmem>>, vector<8x1xf32>
    %c304 = arith.constant 304 : index
    %c0_48 = arith.constant 0 : index
    %274 = vector.load %arg3[%c304, %c0_48] : memref<496x128xf32, #tpu.memory_space<vmem>>, vector<4x8xf32>
    %c312 = arith.constant 312 : index
    %c0_49 = arith.constant 0 : index
    %275 = vector.load %arg3[%c312, %c0_49] : memref<496x128xf32, #tpu.memory_space<vmem>>, vector<4x1xf32>
    %c320 = arith.constant 320 : index
    %c0_50 = arith.constant 0 : index
    %276 = vector.load %arg3[%c320, %c0_50] : memref<496x128xf32, #tpu.memory_space<vmem>>, vector<1x48xf32>
    %c328 = arith.constant 328 : index
    %c0_51 = arith.constant 0 : index
    %277 = vector.load %arg3[%c328, %c0_51] : memref<496x128xf32, #tpu.memory_space<vmem>>, vector<1x48xf32>
    %c336 = arith.constant 336 : index
    %c0_52 = arith.constant 0 : index
    %278 = vector.load %arg3[%c336, %c0_52] : memref<496x128xf32, #tpu.memory_space<vmem>>, vector<48x96xf32>
    %c384 = arith.constant 384 : index
    %c0_53 = arith.constant 0 : index
    %279 = vector.load %arg3[%c384, %c0_53] : memref<496x128xf32, #tpu.memory_space<vmem>>, vector<1x96xf32>
    %c392 = arith.constant 392 : index
    %c0_54 = arith.constant 0 : index
    %280 = vector.load %arg3[%c392, %c0_54] : memref<496x128xf32, #tpu.memory_space<vmem>>, vector<96x48xf32>
    %c488 = arith.constant 488 : index
    %c0_55 = arith.constant 0 : index
    %281 = vector.load %arg3[%c488, %c0_55] : memref<496x128xf32, #tpu.memory_space<vmem>>, vector<1x48xf32>
    %cst_56 = arith.constant dense<0.000000e+00> : vector<8xf32>
    %282 = vector.multi_reduction <add>, %269, %cst_56 [1] : vector<8x48xf32> to vector<8xf32>
    %283 = vector.shape_cast %282 : vector<8xf32> to vector<8x1xf32>
    %cst_57 = arith.constant 4.800000e+01 : f32
    %284 = vector.broadcast %cst_57 : f32 to vector<8x1xf32>
    %285 = arith.divf %283, %284 : vector<8x1xf32>
    %286 = vector.broadcast %285 : vector<8x1xf32> to vector<8x48xf32>
    %287 = arith.subf %269, %286 : vector<8x48xf32>
    %288 = arith.mulf %287, %287 : vector<8x48xf32>
    %cst_58 = arith.constant dense<0.000000e+00> : vector<8xf32>
    %289 = vector.multi_reduction <add>, %288, %cst_58 [1] : vector<8x48xf32> to vector<8xf32>
    %290 = vector.shape_cast %289 : vector<8xf32> to vector<8x1xf32>
    %cst_59 = arith.constant 4.800000e+01 : f32
    %291 = vector.broadcast %cst_59 : f32 to vector<8x1xf32>
    %292 = arith.divf %290, %291 : vector<8x1xf32>
    %293 = vector.broadcast %285 : vector<8x1xf32> to vector<8x48xf32>
    %294 = arith.subf %269, %293 : vector<8x48xf32>
    %cst_60 = arith.constant 9.99999974E-6 : f32
    %295 = vector.broadcast %cst_60 : f32 to vector<8x1xf32>
    %296 = arith.addf %292, %295 : vector<8x1xf32>
    %297 = math.rsqrt %296 : vector<8x1xf32>
    %298 = vector.broadcast %297 : vector<8x1xf32> to vector<8x48xf32>
    %299 = arith.mulf %294, %298 : vector<8x48xf32>
    %300 = vector.broadcast %270 : vector<1x48xf32> to vector<8x48xf32>
    %301 = arith.mulf %299, %300 : vector<8x48xf32>
    %302 = vector.broadcast %271 : vector<1x48xf32> to vector<8x48xf32>
    %303 = arith.addf %301, %302 : vector<8x48xf32>
    %304 = vector.extract_strided_slice %303 {offsets = [0, 0], sizes = [4, 48], strides = [1, 1]} : vector<8x48xf32> to vector<4x48xf32>
    %305 = vector.extract_strided_slice %272 {offsets = [0, 0], sizes = [8, 1], strides = [1, 1]} : vector<8x4xf32> to vector<8x1xf32>
    %306 = vector.extract_strided_slice %304 {offsets = [0, 0], sizes = [1, 48], strides = [1, 1]} : vector<4x48xf32> to vector<1x48xf32>
    %307 = vector.broadcast %305 : vector<8x1xf32> to vector<8x48xf32>
    %308 = vector.broadcast %306 : vector<1x48xf32> to vector<8x48xf32>
    %309 = arith.mulf %307, %308 : vector<8x48xf32>
    %310 = vector.extract_strided_slice %272 {offsets = [0, 1], sizes = [8, 1], strides = [1, 1]} : vector<8x4xf32> to vector<8x1xf32>
    %311 = vector.extract_strided_slice %304 {offsets = [1, 0], sizes = [1, 48], strides = [1, 1]} : vector<4x48xf32> to vector<1x48xf32>
    %312 = vector.broadcast %310 : vector<8x1xf32> to vector<8x48xf32>
    %313 = vector.broadcast %311 : vector<1x48xf32> to vector<8x48xf32>
    %314 = arith.mulf %312, %313 : vector<8x48xf32>
    %315 = arith.addf %309, %314 : vector<8x48xf32>
    %316 = vector.extract_strided_slice %272 {offsets = [0, 2], sizes = [8, 1], strides = [1, 1]} : vector<8x4xf32> to vector<8x1xf32>
    %317 = vector.extract_strided_slice %304 {offsets = [2, 0], sizes = [1, 48], strides = [1, 1]} : vector<4x48xf32> to vector<1x48xf32>
    %318 = vector.broadcast %316 : vector<8x1xf32> to vector<8x48xf32>
    %319 = vector.broadcast %317 : vector<1x48xf32> to vector<8x48xf32>
    %320 = arith.mulf %318, %319 : vector<8x48xf32>
    %321 = arith.addf %315, %320 : vector<8x48xf32>
    %322 = vector.extract_strided_slice %272 {offsets = [0, 3], sizes = [8, 1], strides = [1, 1]} : vector<8x4xf32> to vector<8x1xf32>
    %323 = vector.extract_strided_slice %304 {offsets = [3, 0], sizes = [1, 48], strides = [1, 1]} : vector<4x48xf32> to vector<1x48xf32>
    %324 = vector.broadcast %322 : vector<8x1xf32> to vector<8x48xf32>
    %325 = vector.broadcast %323 : vector<1x48xf32> to vector<8x48xf32>
    %326 = arith.mulf %324, %325 : vector<8x48xf32>
    %327 = arith.addf %321, %326 : vector<8x48xf32>
    %328 = vector.broadcast %273 : vector<8x1xf32> to vector<8x48xf32>
    %329 = arith.addf %327, %328 : vector<8x48xf32>
    %cst_61 = arith.constant 5.000000e-01 : f32
    %330 = vector.broadcast %cst_61 : f32 to vector<8x48xf32>
    %331 = arith.mulf %330, %329 : vector<8x48xf32>
    %cst_62 = arith.constant 4.471500e-02 : f32
    %332 = vector.broadcast %cst_62 : f32 to vector<8x48xf32>
    %333 = arith.mulf %332, %329 : vector<8x48xf32>
    %334 = arith.mulf %333, %329 : vector<8x48xf32>
    %335 = arith.mulf %334, %329 : vector<8x48xf32>
    %336 = arith.addf %329, %335 : vector<8x48xf32>
    %cst_63 = arith.constant 0.797884583 : f32
    %337 = vector.broadcast %cst_63 : f32 to vector<8x48xf32>
    %338 = arith.mulf %337, %336 : vector<8x48xf32>
    %339 = math.tanh %338 : vector<8x48xf32>
    %cst_64 = arith.constant 1.000000e+00 : f32
    %340 = vector.broadcast %cst_64 : f32 to vector<8x48xf32>
    %341 = arith.addf %340, %339 : vector<8x48xf32>
    %342 = arith.mulf %331, %341 : vector<8x48xf32>
    %343 = vector.extract_strided_slice %274 {offsets = [0, 0], sizes = [4, 1], strides = [1, 1]} : vector<4x8xf32> to vector<4x1xf32>
    %344 = vector.extract_strided_slice %342 {offsets = [0, 0], sizes = [1, 48], strides = [1, 1]} : vector<8x48xf32> to vector<1x48xf32>
    %345 = vector.broadcast %343 : vector<4x1xf32> to vector<4x48xf32>
    %346 = vector.broadcast %344 : vector<1x48xf32> to vector<4x48xf32>
    %347 = arith.mulf %345, %346 : vector<4x48xf32>
    %348 = vector.extract_strided_slice %274 {offsets = [0, 1], sizes = [4, 1], strides = [1, 1]} : vector<4x8xf32> to vector<4x1xf32>
    %349 = vector.extract_strided_slice %342 {offsets = [1, 0], sizes = [1, 48], strides = [1, 1]} : vector<8x48xf32> to vector<1x48xf32>
    %350 = vector.broadcast %348 : vector<4x1xf32> to vector<4x48xf32>
    %351 = vector.broadcast %349 : vector<1x48xf32> to vector<4x48xf32>
    %352 = arith.mulf %350, %351 : vector<4x48xf32>
    %353 = arith.addf %347, %352 : vector<4x48xf32>
    %354 = vector.extract_strided_slice %274 {offsets = [0, 2], sizes = [4, 1], strides = [1, 1]} : vector<4x8xf32> to vector<4x1xf32>
    %355 = vector.extract_strided_slice %342 {offsets = [2, 0], sizes = [1, 48], strides = [1, 1]} : vector<8x48xf32> to vector<1x48xf32>
    %356 = vector.broadcast %354 : vector<4x1xf32> to vector<4x48xf32>
    %357 = vector.broadcast %355 : vector<1x48xf32> to vector<4x48xf32>
    %358 = arith.mulf %356, %357 : vector<4x48xf32>
    %359 = arith.addf %353, %358 : vector<4x48xf32>
    %360 = vector.extract_strided_slice %274 {offsets = [0, 3], sizes = [4, 1], strides = [1, 1]} : vector<4x8xf32> to vector<4x1xf32>
    %361 = vector.extract_strided_slice %342 {offsets = [3, 0], sizes = [1, 48], strides = [1, 1]} : vector<8x48xf32> to vector<1x48xf32>
    %362 = vector.broadcast %360 : vector<4x1xf32> to vector<4x48xf32>
    %363 = vector.broadcast %361 : vector<1x48xf32> to vector<4x48xf32>
    %364 = arith.mulf %362, %363 : vector<4x48xf32>
    %365 = arith.addf %359, %364 : vector<4x48xf32>
    %366 = vector.extract_strided_slice %274 {offsets = [0, 4], sizes = [4, 1], strides = [1, 1]} : vector<4x8xf32> to vector<4x1xf32>
    %367 = vector.extract_strided_slice %342 {offsets = [4, 0], sizes = [1, 48], strides = [1, 1]} : vector<8x48xf32> to vector<1x48xf32>
    %368 = vector.broadcast %366 : vector<4x1xf32> to vector<4x48xf32>
    %369 = vector.broadcast %367 : vector<1x48xf32> to vector<4x48xf32>
    %370 = arith.mulf %368, %369 : vector<4x48xf32>
    %371 = arith.addf %365, %370 : vector<4x48xf32>
    %372 = vector.extract_strided_slice %274 {offsets = [0, 5], sizes = [4, 1], strides = [1, 1]} : vector<4x8xf32> to vector<4x1xf32>
    %373 = vector.extract_strided_slice %342 {offsets = [5, 0], sizes = [1, 48], strides = [1, 1]} : vector<8x48xf32> to vector<1x48xf32>
    %374 = vector.broadcast %372 : vector<4x1xf32> to vector<4x48xf32>
    %375 = vector.broadcast %373 : vector<1x48xf32> to vector<4x48xf32>
    %376 = arith.mulf %374, %375 : vector<4x48xf32>
    %377 = arith.addf %371, %376 : vector<4x48xf32>
    %378 = vector.extract_strided_slice %274 {offsets = [0, 6], sizes = [4, 1], strides = [1, 1]} : vector<4x8xf32> to vector<4x1xf32>
    %379 = vector.extract_strided_slice %342 {offsets = [6, 0], sizes = [1, 48], strides = [1, 1]} : vector<8x48xf32> to vector<1x48xf32>
    %380 = vector.broadcast %378 : vector<4x1xf32> to vector<4x48xf32>
    %381 = vector.broadcast %379 : vector<1x48xf32> to vector<4x48xf32>
    %382 = arith.mulf %380, %381 : vector<4x48xf32>
    %383 = arith.addf %377, %382 : vector<4x48xf32>
    %384 = vector.extract_strided_slice %274 {offsets = [0, 7], sizes = [4, 1], strides = [1, 1]} : vector<4x8xf32> to vector<4x1xf32>
    %385 = vector.extract_strided_slice %342 {offsets = [7, 0], sizes = [1, 48], strides = [1, 1]} : vector<8x48xf32> to vector<1x48xf32>
    %386 = vector.broadcast %384 : vector<4x1xf32> to vector<4x48xf32>
    %387 = vector.broadcast %385 : vector<1x48xf32> to vector<4x48xf32>
    %388 = arith.mulf %386, %387 : vector<4x48xf32>
    %389 = arith.addf %383, %388 : vector<4x48xf32>
    %390 = vector.broadcast %275 : vector<4x1xf32> to vector<4x48xf32>
    %391 = arith.addf %389, %390 : vector<4x48xf32>
    %392 = vector.extract_strided_slice %303 {offsets = [4, 0], sizes = [4, 48], strides = [1, 1]} : vector<8x48xf32> to vector<4x48xf32>
    %393 = vector.extract_strided_slice %272 {offsets = [0, 0], sizes = [8, 1], strides = [1, 1]} : vector<8x4xf32> to vector<8x1xf32>
    %394 = vector.extract_strided_slice %392 {offsets = [0, 0], sizes = [1, 48], strides = [1, 1]} : vector<4x48xf32> to vector<1x48xf32>
    %395 = vector.broadcast %393 : vector<8x1xf32> to vector<8x48xf32>
    %396 = vector.broadcast %394 : vector<1x48xf32> to vector<8x48xf32>
    %397 = arith.mulf %395, %396 : vector<8x48xf32>
    %398 = vector.extract_strided_slice %272 {offsets = [0, 1], sizes = [8, 1], strides = [1, 1]} : vector<8x4xf32> to vector<8x1xf32>
    %399 = vector.extract_strided_slice %392 {offsets = [1, 0], sizes = [1, 48], strides = [1, 1]} : vector<4x48xf32> to vector<1x48xf32>
    %400 = vector.broadcast %398 : vector<8x1xf32> to vector<8x48xf32>
    %401 = vector.broadcast %399 : vector<1x48xf32> to vector<8x48xf32>
    %402 = arith.mulf %400, %401 : vector<8x48xf32>
    %403 = arith.addf %397, %402 : vector<8x48xf32>
    %404 = vector.extract_strided_slice %272 {offsets = [0, 2], sizes = [8, 1], strides = [1, 1]} : vector<8x4xf32> to vector<8x1xf32>
    %405 = vector.extract_strided_slice %392 {offsets = [2, 0], sizes = [1, 48], strides = [1, 1]} : vector<4x48xf32> to vector<1x48xf32>
    %406 = vector.broadcast %404 : vector<8x1xf32> to vector<8x48xf32>
    %407 = vector.broadcast %405 : vector<1x48xf32> to vector<8x48xf32>
    %408 = arith.mulf %406, %407 : vector<8x48xf32>
    %409 = arith.addf %403, %408 : vector<8x48xf32>
    %410 = vector.extract_strided_slice %272 {offsets = [0, 3], sizes = [8, 1], strides = [1, 1]} : vector<8x4xf32> to vector<8x1xf32>
    %411 = vector.extract_strided_slice %392 {offsets = [3, 0], sizes = [1, 48], strides = [1, 1]} : vector<4x48xf32> to vector<1x48xf32>
    %412 = vector.broadcast %410 : vector<8x1xf32> to vector<8x48xf32>
    %413 = vector.broadcast %411 : vector<1x48xf32> to vector<8x48xf32>
    %414 = arith.mulf %412, %413 : vector<8x48xf32>
    %415 = arith.addf %409, %414 : vector<8x48xf32>
    %416 = vector.broadcast %273 : vector<8x1xf32> to vector<8x48xf32>
    %417 = arith.addf %415, %416 : vector<8x48xf32>
    %cst_65 = arith.constant 5.000000e-01 : f32
    %418 = vector.broadcast %cst_65 : f32 to vector<8x48xf32>
    %419 = arith.mulf %418, %417 : vector<8x48xf32>
    %cst_66 = arith.constant 4.471500e-02 : f32
    %420 = vector.broadcast %cst_66 : f32 to vector<8x48xf32>
    %421 = arith.mulf %420, %417 : vector<8x48xf32>
    %422 = arith.mulf %421, %417 : vector<8x48xf32>
    %423 = arith.mulf %422, %417 : vector<8x48xf32>
    %424 = arith.addf %417, %423 : vector<8x48xf32>
    %cst_67 = arith.constant 0.797884583 : f32
    %425 = vector.broadcast %cst_67 : f32 to vector<8x48xf32>
    %426 = arith.mulf %425, %424 : vector<8x48xf32>
    %427 = math.tanh %426 : vector<8x48xf32>
    %cst_68 = arith.constant 1.000000e+00 : f32
    %428 = vector.broadcast %cst_68 : f32 to vector<8x48xf32>
    %429 = arith.addf %428, %427 : vector<8x48xf32>
    %430 = arith.mulf %419, %429 : vector<8x48xf32>
    %431 = vector.extract_strided_slice %274 {offsets = [0, 0], sizes = [4, 1], strides = [1, 1]} : vector<4x8xf32> to vector<4x1xf32>
    %432 = vector.extract_strided_slice %430 {offsets = [0, 0], sizes = [1, 48], strides = [1, 1]} : vector<8x48xf32> to vector<1x48xf32>
    %433 = vector.broadcast %431 : vector<4x1xf32> to vector<4x48xf32>
    %434 = vector.broadcast %432 : vector<1x48xf32> to vector<4x48xf32>
    %435 = arith.mulf %433, %434 : vector<4x48xf32>
    %436 = vector.extract_strided_slice %274 {offsets = [0, 1], sizes = [4, 1], strides = [1, 1]} : vector<4x8xf32> to vector<4x1xf32>
    %437 = vector.extract_strided_slice %430 {offsets = [1, 0], sizes = [1, 48], strides = [1, 1]} : vector<8x48xf32> to vector<1x48xf32>
    %438 = vector.broadcast %436 : vector<4x1xf32> to vector<4x48xf32>
    %439 = vector.broadcast %437 : vector<1x48xf32> to vector<4x48xf32>
    %440 = arith.mulf %438, %439 : vector<4x48xf32>
    %441 = arith.addf %435, %440 : vector<4x48xf32>
    %442 = vector.extract_strided_slice %274 {offsets = [0, 2], sizes = [4, 1], strides = [1, 1]} : vector<4x8xf32> to vector<4x1xf32>
    %443 = vector.extract_strided_slice %430 {offsets = [2, 0], sizes = [1, 48], strides = [1, 1]} : vector<8x48xf32> to vector<1x48xf32>
    %444 = vector.broadcast %442 : vector<4x1xf32> to vector<4x48xf32>
    %445 = vector.broadcast %443 : vector<1x48xf32> to vector<4x48xf32>
    %446 = arith.mulf %444, %445 : vector<4x48xf32>
    %447 = arith.addf %441, %446 : vector<4x48xf32>
    %448 = vector.extract_strided_slice %274 {offsets = [0, 3], sizes = [4, 1], strides = [1, 1]} : vector<4x8xf32> to vector<4x1xf32>
    %449 = vector.extract_strided_slice %430 {offsets = [3, 0], sizes = [1, 48], strides = [1, 1]} : vector<8x48xf32> to vector<1x48xf32>
    %450 = vector.broadcast %448 : vector<4x1xf32> to vector<4x48xf32>
    %451 = vector.broadcast %449 : vector<1x48xf32> to vector<4x48xf32>
    %452 = arith.mulf %450, %451 : vector<4x48xf32>
    %453 = arith.addf %447, %452 : vector<4x48xf32>
    %454 = vector.extract_strided_slice %274 {offsets = [0, 4], sizes = [4, 1], strides = [1, 1]} : vector<4x8xf32> to vector<4x1xf32>
    %455 = vector.extract_strided_slice %430 {offsets = [4, 0], sizes = [1, 48], strides = [1, 1]} : vector<8x48xf32> to vector<1x48xf32>
    %456 = vector.broadcast %454 : vector<4x1xf32> to vector<4x48xf32>
    %457 = vector.broadcast %455 : vector<1x48xf32> to vector<4x48xf32>
    %458 = arith.mulf %456, %457 : vector<4x48xf32>
    %459 = arith.addf %453, %458 : vector<4x48xf32>
    %460 = vector.extract_strided_slice %274 {offsets = [0, 5], sizes = [4, 1], strides = [1, 1]} : vector<4x8xf32> to vector<4x1xf32>
    %461 = vector.extract_strided_slice %430 {offsets = [5, 0], sizes = [1, 48], strides = [1, 1]} : vector<8x48xf32> to vector<1x48xf32>
    %462 = vector.broadcast %460 : vector<4x1xf32> to vector<4x48xf32>
    %463 = vector.broadcast %461 : vector<1x48xf32> to vector<4x48xf32>
    %464 = arith.mulf %462, %463 : vector<4x48xf32>
    %465 = arith.addf %459, %464 : vector<4x48xf32>
    %466 = vector.extract_strided_slice %274 {offsets = [0, 6], sizes = [4, 1], strides = [1, 1]} : vector<4x8xf32> to vector<4x1xf32>
    %467 = vector.extract_strided_slice %430 {offsets = [6, 0], sizes = [1, 48], strides = [1, 1]} : vector<8x48xf32> to vector<1x48xf32>
    %468 = vector.broadcast %466 : vector<4x1xf32> to vector<4x48xf32>
    %469 = vector.broadcast %467 : vector<1x48xf32> to vector<4x48xf32>
    %470 = arith.mulf %468, %469 : vector<4x48xf32>
    %471 = arith.addf %465, %470 : vector<4x48xf32>
    %472 = vector.extract_strided_slice %274 {offsets = [0, 7], sizes = [4, 1], strides = [1, 1]} : vector<4x8xf32> to vector<4x1xf32>
    %473 = vector.extract_strided_slice %430 {offsets = [7, 0], sizes = [1, 48], strides = [1, 1]} : vector<8x48xf32> to vector<1x48xf32>
    %474 = vector.broadcast %472 : vector<4x1xf32> to vector<4x48xf32>
    %475 = vector.broadcast %473 : vector<1x48xf32> to vector<4x48xf32>
    %476 = arith.mulf %474, %475 : vector<4x48xf32>
    %477 = arith.addf %471, %476 : vector<4x48xf32>
    %478 = vector.broadcast %275 : vector<4x1xf32> to vector<4x48xf32>
    %479 = arith.addf %477, %478 : vector<4x48xf32>
    %480 = tpu.concatenate %391, %479 in 0 : vector<4x48xf32>, vector<4x48xf32> -> vector<8x48xf32>
    %481 = arith.addf %269, %480 : vector<8x48xf32>
    %cst_69 = arith.constant dense<0.000000e+00> : vector<8xf32>
    %482 = vector.multi_reduction <add>, %481, %cst_69 [1] : vector<8x48xf32> to vector<8xf32>
    %483 = vector.shape_cast %482 : vector<8xf32> to vector<8x1xf32>
    %cst_70 = arith.constant 4.800000e+01 : f32
    %484 = vector.broadcast %cst_70 : f32 to vector<8x1xf32>
    %485 = arith.divf %483, %484 : vector<8x1xf32>
    %486 = vector.broadcast %485 : vector<8x1xf32> to vector<8x48xf32>
    %487 = arith.subf %481, %486 : vector<8x48xf32>
    %488 = arith.mulf %487, %487 : vector<8x48xf32>
    %cst_71 = arith.constant dense<0.000000e+00> : vector<8xf32>
    %489 = vector.multi_reduction <add>, %488, %cst_71 [1] : vector<8x48xf32> to vector<8xf32>
    %490 = vector.shape_cast %489 : vector<8xf32> to vector<8x1xf32>
    %cst_72 = arith.constant 4.800000e+01 : f32
    %491 = vector.broadcast %cst_72 : f32 to vector<8x1xf32>
    %492 = arith.divf %490, %491 : vector<8x1xf32>
    %493 = vector.broadcast %485 : vector<8x1xf32> to vector<8x48xf32>
    %494 = arith.subf %481, %493 : vector<8x48xf32>
    %cst_73 = arith.constant 9.99999974E-6 : f32
    %495 = vector.broadcast %cst_73 : f32 to vector<8x1xf32>
    %496 = arith.addf %492, %495 : vector<8x1xf32>
    %497 = math.rsqrt %496 : vector<8x1xf32>
    %498 = vector.broadcast %497 : vector<8x1xf32> to vector<8x48xf32>
    %499 = arith.mulf %494, %498 : vector<8x48xf32>
    %500 = vector.broadcast %276 : vector<1x48xf32> to vector<8x48xf32>
    %501 = arith.mulf %499, %500 : vector<8x48xf32>
    %502 = vector.broadcast %277 : vector<1x48xf32> to vector<8x48xf32>
    %503 = arith.addf %501, %502 : vector<8x48xf32>
    %cst_74 = arith.constant dense<0.000000e+00> : vector<8x96xf32>
    %504 = tpu.matmul %503, %278, %cst_74 {dimension_numbers = #tpu.dot_dimension_numbers<[1], [0], [0], [1], [0, 0, 1, 1], [], []>} : vector<8x48xf32>, vector<48x96xf32>, vector<8x96xf32> -> vector<8x96xf32>
    %505 = vector.broadcast %279 : vector<1x96xf32> to vector<8x96xf32>
    %506 = arith.addf %504, %505 : vector<8x96xf32>
    %cst_75 = arith.constant 5.000000e-01 : f32
    %507 = vector.broadcast %cst_75 : f32 to vector<8x96xf32>
    %508 = arith.mulf %507, %506 : vector<8x96xf32>
    %cst_76 = arith.constant 4.471500e-02 : f32
    %509 = vector.broadcast %cst_76 : f32 to vector<8x96xf32>
    %510 = arith.mulf %509, %506 : vector<8x96xf32>
    %511 = arith.mulf %510, %506 : vector<8x96xf32>
    %512 = arith.mulf %511, %506 : vector<8x96xf32>
    %513 = arith.addf %506, %512 : vector<8x96xf32>
    %cst_77 = arith.constant 0.797884583 : f32
    %514 = vector.broadcast %cst_77 : f32 to vector<8x96xf32>
    %515 = arith.mulf %514, %513 : vector<8x96xf32>
    %516 = math.tanh %515 : vector<8x96xf32>
    %cst_78 = arith.constant 1.000000e+00 : f32
    %517 = vector.broadcast %cst_78 : f32 to vector<8x96xf32>
    %518 = arith.addf %517, %516 : vector<8x96xf32>
    %519 = arith.mulf %508, %518 : vector<8x96xf32>
    %cst_79 = arith.constant dense<0.000000e+00> : vector<8x48xf32>
    %520 = tpu.matmul %519, %280, %cst_79 {dimension_numbers = #tpu.dot_dimension_numbers<[1], [0], [0], [1], [0, 0, 1, 1], [], []>} : vector<8x96xf32>, vector<96x48xf32>, vector<8x48xf32> -> vector<8x48xf32>
    %521 = vector.broadcast %281 : vector<1x48xf32> to vector<8x48xf32>
    %522 = arith.addf %520, %521 : vector<8x48xf32>
    %523 = arith.addf %481, %522 : vector<8x48xf32>
    %c32 = arith.constant 32 : index
    %c0_80 = arith.constant 0 : index
    %524 = vector.load %arg3[%c32, %c0_80] : memref<496x128xf32, #tpu.memory_space<vmem>>, vector<1x48xf32>
    %525 = vector.broadcast %524 : vector<1x48xf32> to vector<8x48xf32>
    %526 = arith.mulf %523, %525 : vector<8x48xf32>
    %cst_81 = arith.constant dense<0.000000e+00> : vector<8xf32>
    %527 = vector.multi_reduction <add>, %526, %cst_81 [1] : vector<8x48xf32> to vector<8xf32>
    %528 = vector.shape_cast %527 : vector<8xf32> to vector<8x1xf32>
    %c40 = arith.constant 40 : index
    %c0_82 = arith.constant 0 : index
    %529 = vector.load %arg3[%c40, %c0_82] : memref<496x128xf32, #tpu.memory_space<vmem>>, vector<1x1xf32>
    %530 = vector.broadcast %529 : vector<1x1xf32> to vector<8x1xf32>
    %531 = arith.addf %528, %530 : vector<8x1xf32>
    %c0_83 = arith.constant 0 : index
    %c0_84 = arith.constant 0 : index
    %532 = vector.load %arg2[%c0_83, %c0_84] : memref<8x4xf32, #tpu.memory_space<vmem>>, vector<8x4xf32>
    %cst_85 = arith.constant dense<0.000000e+00> : vector<8xf32>
    %533 = vector.multi_reduction <add>, %532, %cst_85 [1] : vector<8x4xf32> to vector<8xf32>
    %534 = vector.shape_cast %533 : vector<8xf32> to vector<8x1xf32>
    %cst_86 = arith.constant 0.000000e+00 : f32
    %535 = vector.broadcast %cst_86 : f32 to vector<8x1xf32>
    %536 = arith.cmpf ogt, %534, %535 : vector<8x1xf32>
    %537 = arith.extui %536 : vector<8x1xi1> to vector<8x1xi32>
    %538 = arith.sitofp %537 : vector<8x1xi32> to vector<8x1xf32>
    %cst_87 = arith.constant 0.000000e+00 : f32
    %539 = vector.broadcast %cst_87 : f32 to vector<8x1xf32>
    %540 = arith.maximumf %531, %539 : vector<8x1xf32>
    %541 = arith.mulf %531, %538 : vector<8x1xf32>
    %542 = arith.subf %540, %541 : vector<8x1xf32>
    %543 = math.absf %531 : vector<8x1xf32>
    %cst_88 = arith.constant 0.000000e+00 : f32
    %544 = vector.broadcast %cst_88 : f32 to vector<8x1xf32>
    %545 = arith.subf %544, %543 : vector<8x1xf32>
    %546 = math.exp %545 : vector<8x1xf32>
    %cst_89 = arith.constant 1.000000e+00 : f32
    %547 = vector.broadcast %cst_89 : f32 to vector<8x1xf32>
    %548 = arith.addf %547, %546 : vector<8x1xf32>
    %549 = math.log %548 : vector<8x1xf32>
    %550 = arith.addf %542, %549 : vector<8x1xf32>
    %551 = vector.shape_cast %550 : vector<8x1xf32> to vector<1x8x1xf32>
    %cst_90 = arith.constant dense<0.000000e+00> : vector<1xf32>
    %552 = vector.multi_reduction <add>, %551, %cst_90 [1, 2] : vector<1x8x1xf32> to vector<1xf32>
    %553 = vector.shape_cast %552 : vector<1xf32> to vector<1x1x1xf32>
    %554 = vector.extract %553[0, 0, 0] : f32 from vector<1x1x1xf32>
    %555 = vector.broadcast %554 : f32 to vector<1x1xf32>
    %cst_91 = arith.constant 8.000000e+00 : f32
    %556 = vector.broadcast %cst_91 : f32 to vector<1x1xf32>
    %557 = arith.divf %555, %556 : vector<1x1xf32>
    %c0_92 = arith.constant 0 : index
    %c0_93 = arith.constant 0 : index
    %558 = vector.load %arg4[%c0_92, %c0_93] : memref<1x1xf32, #tpu.memory_space<vmem>>, vector<1x1xf32>
    tpu.vector_store %arg4[%c0_92, %c0_93], %557 {strides = array<i32>} : memref<1x1xf32, #tpu.memory_space<vmem>>, vector<1x1xf32>,
    return
  }
  func.func @transform_0(%arg0: i32) -> (i32, i32) {
    %c0_i32 = arith.constant 0 : i32
    %c0_i32_0 = arith.constant 0 : i32
    %c0_i32_1 = arith.constant 0 : i32
    return %c0_i32, %c0_i32_0 : i32, i32
  }
  func.func @transform_1(%arg0: i32) -> (i32, i32) {
    %c0_i32 = arith.constant 0 : i32
    %c0_i32_0 = arith.constant 0 : i32
    %c0_i32_1 = arith.constant 0 : i32
    return %c0_i32, %c0_i32_0 : i32, i32
  }
  func.func @transform_2(%arg0: i32) -> (i32, i32) {
    %c0_i32 = arith.constant 0 : i32
    %c0_i32_0 = arith.constant 0 : i32
    %c0_i32_1 = arith.constant 0 : i32
    return %c0_i32, %c0_i32_0 : i32, i32
  }
  func.func @transform_3(%arg0: i32) -> (i32, i32) {
    %c0_i32 = arith.constant 0 : i32
    %c0_i32_0 = arith.constant 0 : i32
    %c0_i32_1 = arith.constant 0 : i32
    return %c0_i32, %c0_i32_0 : i32, i32
  }
}

</mosaic_0001>

<llo_original>
// kernel: tpu_custom_call.1
$region0: #{tpu_custom_call.1}
  #allocation0 [shape = 'u32[]', space=smem, size = 0x4, offset = 0x4, fixed_abs, tag = 'smem constant byte address 0x4 - core index']
  #allocation1 [shape = 'u32[72,128]{1,0:T(1,128)}', space=vmem, size = 0x9000, scoped, tag = 'internal scratch']
  %s0 = inlined_call_operand.vmem [shape: f32[8,24], index: 0, kind: input, shape index: {}]
  %s1 = inlined_call_operand.vmem [shape: f32[8,4], index: 1, kind: input, shape index: {}]
  %s2 = inlined_call_operand.hbm [shape: f32[496,128], index: 2, kind: input, shape index: {}]
  %s3 = inlined_call_operand.hbm [shape: f32[1,1], index: 3, kind: output, shape index: {}]
  %s4 = sld [smem:[#allocation0]]
  $region26: #{tpu_custom_call.1} parent=0
    _
  %s6 = ssub.s32 1, %s4
  %s7 = scalar_select 0, %s6, %s4
  $region1: #{tpu_custom_call.1} parent=0
    #allocation2 [shape = 'u8[253952]{0}', space=vmem, size = 0x3e000, scoped, tag = 'input window, operand 2, single buffered']
    #allocation3 [shape = 's32[1]{0}', space=sflag, size = 0x4, scoped, tag = 'scoped memory for tpu_custom_call.1']
    #allocation4 [shape = 's32[1]{0}', space=sflag, size = 0x4, scoped, tag = 'scoped memory for tpu_custom_call.1']
    #allocation5 [shape = 'u8[512]{0}', space=vmem, size = 0x400, scoped, tag = 'output window, operand 0, single buffered']
    %8 = vsyncpa [#allocation3], 0
    %9 = vsyncpa [#allocation4], 0
    // Predicated region
    $region2: #{tpu_custom_call.1} parent=1 // pred_check
      _
    $region3: #{tpu_custom_call.1} parent=1 // pred_check_branch
      %11 = sbr.rel (0) target = $region5
    $region4: #{tpu_custom_call.1} parent=1 // pred_region
      _
    $region5: #{tpu_custom_call.1} parent=1 // pred_fallthru
      _
    // Predicated region
    $region6: #{tpu_custom_call.1} parent=1 // pred_check
      _
    $region7: #{tpu_custom_call.1} parent=1 // pred_check_branch
      %13 = sbr.rel (0) target = $region9
    $region8: #{tpu_custom_call.1} parent=1 // pred_region
      _
    $region9: #{tpu_custom_call.1} parent=1 // pred_fallthru
      _
    // Predicated region
    $region10: #{tpu_custom_call.1} parent=1 // pred_check
      _
    $region11: #{tpu_custom_call.1} parent=1 // pred_check_branch
      %15 = sbr.rel (0) target = $region13
    $region12: #{tpu_custom_call.1} parent=1 // pred_region
      %17 = vsyncadd [#allocation3], 0
      %s18 = sshll.u32 %s2, 4
      %s19 = int_to_ptr.hbm [resolvable:$true] %s18
      %s20 = sshll.u32 [#allocation2], 4
      %s21 = int_to_ptr.vmem [resolvable:$true] %s20
      %26 = dma.hbm_to_vmem [thread:$0]  %s19, 7936, %s21, [#allocation3], 128, 128, 8
    $region13: #{tpu_custom_call.1} parent=1 // pred_fallthru
      _
    // Predicated region
    $region14: #{tpu_custom_call.1} parent=1 // pred_check
      _
    $region15: #{tpu_custom_call.1} parent=1 // pred_check_branch
      %28 = sbr.rel (0) target = $region17
    $region16: #{tpu_custom_call.1} parent=1 // pred_region
      %30 = dma.done [#allocation3], 7936
    $region17: #{tpu_custom_call.1} parent=1 // pred_fallthru
      _
    %v31 = vld [vmem:[%s0] sm:$0xff]
    %v32 = vld [vmem:[#allocation2] sm:$0xff]
    %v33 = vld [vmem:[#allocation2 + $0x8] sm:$0xff]
    %v34 = vld [vmem:[#allocation2 + $0x10] sm:$0xff]
    %v35 = vld [vmem:[#allocation2 + $0x18] sm:$0x1]
    %v36 = vperm.slane %v35, 0
    %vm37 = vcmask 195584
    %v39 = vsel %vm37, %v31, 0
    %41 = vmatpush.msra.mxu0 0.0
    %42 = vmatpush.msra.mxu0 0.0
    %43 = vmatpush.msra.mxu0 0.0
    %44 = vmatpush.msra.mxu0 0.0
    %45 = vmatpush.msra.mxu0 0.0
    %46 = vmatpush.msra.mxu0 0.0
    %47 = vmatpush.msra.mxu0 0.0
    %48 = vmatpush.msra.mxu0 0.0
    %49 = vmatpush.msra.mxu0 0.0
    %50 = vmatpush.msra.mxu0 0.0
    %51 = vmatpush.msra.mxu0 0.0
    %52 = vmatpush.msra.mxu0 0.0
    %53 = vmatpush.msra.mxu0 0.0
    %54 = vmatpush.msra.mxu0 %v34
    %55 = vmatpush.msra.mxu0 %v33
    %56 = vmatpush.msra.mxu0 %v32
    %57 = vmatmul.f32.gmra.mxu0 %v39
    %v58 = vpop.f32.mrf.mxu0
    %v59 = vadd.f32 %v36, %v58
    %60 = vdwg.mxu0
    %vm61 = vcmp.gt.f32.partialorder %v59, 0.0
    %v62 = vmul.f32 %v59, 1.442695
    %v63 = vpow.pop %v62
    %v64 = vsub.f32 %v63, 1.0
    %v65 = vmul.f32 %v64, 1.6732632
    %v66 = vsel %vm61, %v59, %v65
    %v67 = vmul.f32 %v66, 1.050701
    %v68 = vld [vmem:[#allocation2 + $0x30] sm:$0x1]
    %v69 = vld [vmem:[#allocation2 + $0x38] sm:$0x1]
    %v70 = vld [vmem:[#allocation2 + $0x40] sm:$0xff]
    %v71 = vld [vmem:[#allocation2 + $0x48] sm:$0xff]
    %v72 = vld [vmem:[#allocation2 + $0x50] sm:$0xf]
    %v73 = vld [vmem:[#allocation2 + $0x58] sm:$0xf]
    %v74 = vld [vmem:[#allocation2 + $0x60] sm:$0x1]
    %v75 = vld [vmem:[#allocation2 + $0x68] sm:$0x1]
    %v76 = vld [vmem:[#allocation2 + $0x70] sm:$0xff]
    %v77 = vld [vmem:[#allocation2 + $0x78] sm:$0xff]
    %v78 = vld [vmem:[#allocation2 + $0x80] sm:$0xff]
    %v79 = vld [vmem:[#allocation2 + $0x88] sm:$0xff]
    %v80 = vld [vmem:[#allocation2 + $0x90] sm:$0xff]
    %v81 = vld [vmem:[#allocation2 + $0x98] sm:$0xff]
    %v82 = vld [vmem:[#allocation2 + $0xa0] sm:$0x1]
    %v83 = vld [vmem:[#allocation2 + $0xa8] sm:$0xff]
    %v84 = vld [vmem:[#allocation2 + $0xb0] sm:$0xff]
    %v85 = vld [vmem:[#allocation2 + $0xb8] sm:$0xff]
    %v86 = vld [vmem:[#allocation2 + $0xc0] sm:$0xff]
    %v87 = vld [vmem:[#allocation2 + $0xc8] sm:$0xff]
    %v88 = vld [vmem:[#allocation2 + $0xd0] sm:$0xff]
    %v89 = vld [vmem:[#allocation2 + $0xd8] sm:$0xff]
    %v90 = vld [vmem:[#allocation2 + $0xe0] sm:$0xff]
    %v91 = vld [vmem:[#allocation2 + $0xe8] sm:$0xff]
    %v92 = vld [vmem:[#allocation2 + $0xf0] sm:$0xff]
    %v93 = vld [vmem:[#allocation2 + $0xf8] sm:$0xff]
    %v94 = vld [vmem:[#allocation2 + $0x100] sm:$0xff]
    %v95 = vld [vmem:[#allocation2 + $0x108] sm:$0x1]
    %vm96 = vcmask 392192
    %v97 = vsel %vm96, %v67, 0.0
    %98 = vadd.xlane.f32.xlu0 %v97
    %v99 = vpop.xlane.xlu0 %98
    %v100 = vrcp.pop 48.0
    %v101 = vmul.f32 48.0, %v100
    %v102 = vsub.f32 1.0, %v101
    %v103 = vmul.f32 %v100, %v102
    %v104 = vadd.f32 %v100, %v103
    %vm105 = vweird.f32 %v100
    %v106 = vsel %vm105, %v100, %v104
    %v107 = vmul.f32 %v99, %v106
    %v108 = vsub.f32 %v67, %v107
    %v109 = vmul.f32 %v108, %v108
    %v110 = vsel %vm96, %v109, 0.0
    %111 = vadd.xlane.f32.xlu0 %v110
    %v112 = vpop.xlane.xlu0 %111
    %v113 = vmul.f32 %v112, %v106
    %v114 = vadd.f32 %v113, 1e-05
    %v115 = vrsqrt.pop %v114
    %v116 = vmul.f32 %v115, %v114
    %v117 = vmul.f32 %v116, %v115
    %v118 = vmul.f32 0.5, %v117
    %v119 = vsub.f32 1.5, %v118
    %v120 = vmul.f32 %v115, %v119
    %vm121 = vweird.f32 %v114
    %vm122 = vweird.f32 %v115
    %vm123 = vmor %vm121, %vm122
    %v124 = vsel %vm123, %v115, %v120
    %v125 = vmul.f32 %v108, %v124
    %v126 = vperm.slane %v68, 0
    %v127 = vmul.f32 %v125, %v126
    %v128 = vperm.slane %v69, 0
    %v129 = vadd.f32 %v127, %v128
    %131 = vset.pattern.permute.xlu0 0
    %132 = vperm.xlu0 %131, %v70
    %v133 = vpop.permute.xlu0 %132
    %v135 = vperm.slane %v129, 0
    %v136 = vmul.f32 %v133, %v135
    %137 = vset.pattern.permute.xlu0 1
    %138 = vperm.xlu0 %137, %v70
    %v139 = vpop.permute.xlu0 %138
    %v141 = vperm.slane %v129, 1
    %v142 = vmul.f32 %v139, %v141
    %v143 = vadd.f32 %v136, %v142
    %144 = vset.pattern.permute.xlu0 2
    %145 = vperm.xlu0 %144, %v70
    %v146 = vpop.permute.xlu0 %145
    %v148 = vperm.slane %v129, 2
    %v149 = vmul.f32 %v146, %v148
    %v150 = vadd.f32 %v143, %v149
    %151 = vset.pattern.permute.xlu0 3
    %152 = vperm.xlu0 %151, %v70
    %v153 = vpop.permute.xlu0 %152
    %v155 = vperm.slane %v129, 3
    %v156 = vmul.f32 %v153, %v155
    %v157 = vadd.f32 %v150, %v156
    %159 = vset.pattern.permute.xlu0 0
    %160 = vperm.xlu0 %159, %v71
    %v161 = vpop.permute.xlu0 %160
    %v163 = vadd.f32 %v157, %v161
    %v164 = vmul.f32 %v163, 0.5
    %v165 = vmul.f32 %v163, 0.044715
    %v166 = vmul.f32 %v165, %v163
    %v167 = vmul.f32 %v166, %v163
    %v168 = vadd.f32 %v163, %v167
    %v169 = vmul.f32 %v168, 0.7978846
    %v170 = vtanh.pop %v169
    %v171 = vadd.f32 %v170, 1.0
    %v172 = vmul.f32 %v164, %v171
    %174 = vset.pattern.permute.xlu0 0
    %175 = vperm.xlu0 %174, %v72
    %v176 = vpop.permute.xlu0 %175
    %v178 = vperm.slane %v172, 0
    %v179 = vmul.f32 %v176, %v178
    %180 = vset.pattern.permute.xlu0 1
    %181 = vperm.xlu0 %180, %v72
    %v182 = vpop.permute.xlu0 %181
    %v184 = vperm.slane %v172, 1
    %v185 = vmul.f32 %v182, %v184
    %v186 = vadd.f32 %v179, %v185
    %187 = vset.pattern.permute.xlu0 2
    %188 = vperm.xlu0 %187, %v72
    %v189 = vpop.permute.xlu0 %188
    %v191 = vperm.slane %v172, 2
    %v192 = vmul.f32 %v189, %v191
    %v193 = vadd.f32 %v186, %v192
    %194 = vset.pattern.permute.xlu0 3
    %195 = vperm.xlu0 %194, %v72
    %v196 = vpop.permute.xlu0 %195
    %v198 = vperm.slane %v172, 3
    %v199 = vmul.f32 %v196, %v198
    %v200 = vadd.f32 %v193, %v199
    %201 = vset.pattern.permute.xlu0 4
    %202 = vperm.xlu0 %201, %v72
    %v203 = vpop.permute.xlu0 %202
    %v205 = vperm.slane %v172, 4
    %v206 = vmul.f32 %v203, %v205
    %v207 = vadd.f32 %v200, %v206
    %208 = vset.pattern.permute.xlu0 5
    %209 = vperm.xlu0 %208, %v72
    %v210 = vpop.permute.xlu0 %209
    %v212 = vperm.slane %v172, 5
    %v213 = vmul.f32 %v210, %v212
    %v214 = vadd.f32 %v207, %v213
    %215 = vset.pattern.permute.xlu0 6
    %216 = vperm.xlu0 %215, %v72
    %v217 = vpop.permute.xlu0 %216
    %v219 = vperm.slane %v172, 6
    %v220 = vmul.f32 %v217, %v219
    %v221 = vadd.f32 %v214, %v220
    %222 = vset.pattern.permute.xlu0 7
    %223 = vperm.xlu0 %222, %v72
    %v224 = vpop.permute.xlu0 %223
    %v226 = vperm.slane %v172, 7
    %v227 = vmul.f32 %v224, %v226
    %v228 = vadd.f32 %v221, %v227
    %230 = vset.pattern.permute.xlu0 0
    %231 = vperm.xlu0 %230, %v73
    %v232 = vpop.permute.xlu0 %231
    %v234 = vadd.f32 %v228, %v232
    %v235 = vperm.slane %v129, 4
    %v236 = vmul.f32 %v133, %v235
    %v237 = vperm.slane %v129, 5
    %v238 = vmul.f32 %v139, %v237
    %v239 = vadd.f32 %v236, %v238
    %v240 = vperm.slane %v129, 6
    %v241 = vmul.f32 %v146, %v240
    %v242 = vadd.f32 %v239, %v241
    %v243 = vperm.slane %v129, 7
    %v244 = vmul.f32 %v153, %v243
    %v245 = vadd.f32 %v242, %v244
    %v246 = vadd.f32 %v245, %v161
    %v247 = vmul.f32 %v246, 0.5
    %v248 = vmul.f32 %v246, 0.044715
    %v249 = vmul.f32 %v248, %v246
    %v250 = vmul.f32 %v249, %v246
    %v251 = vadd.f32 %v246, %v250
    %v252 = vmul.f32 %v251, 0.7978846
    %v253 = vtanh.pop %v252
    %v254 = vadd.f32 %v253, 1.0
    %v255 = vmul.f32 %v247, %v254
    %v256 = vperm.slane %v255, 0
    %v257 = vmul.f32 %v176, %v256
    %v258 = vperm.slane %v255, 1
    %v259 = vmul.f32 %v182, %v258
    %v260 = vadd.f32 %v257, %v259
    %v261 = vperm.slane %v255, 2
    %v262 = vmul.f32 %v189, %v261
    %v263 = vadd.f32 %v260, %v262
    %v264 = vperm.slane %v255, 3
    %v265 = vmul.f32 %v196, %v264
    %v266 = vadd.f32 %v263, %v265
    %v267 = vperm.slane %v255, 4
    %v268 = vmul.f32 %v203, %v267
    %v269 = vadd.f32 %v266, %v268
    %v270 = vperm.slane %v255, 5
    %v271 = vmul.f32 %v210, %v270
    %v272 = vadd.f32 %v269, %v271
    %v273 = vperm.slane %v255, 6
    %v274 = vmul.f32 %v217, %v273
    %v275 = vadd.f32 %v272, %v274
    %v276 = vperm.slane %v255, 7
    %v277 = vmul.f32 %v224, %v276
    %v278 = vadd.f32 %v275, %v277
    %v279 = vadd.f32 %v278, %v232
    %v281 = vrot.slane %v279, 4
    %vm283 = vcmask 1043456
    %v284 = vsel %vm283, %v234, %v281
    %v285 = vadd.f32 %v67, %v284
    %v286 = vsel %vm96, %v285, 0.0
    %287 = vadd.xlane.f32.xlu0 %v286
    %v288 = vpop.xlane.xlu0 %287
    %v289 = vmul.f32 %v288, %v106
    %v290 = vsub.f32 %v285, %v289
    %v291 = vmul.f32 %v290, %v290
    %v292 = vsel %vm96, %v291, 0.0
    %293 = vadd.xlane.f32.xlu0 %v292
    %v294 = vpop.xlane.xlu0 %293
    %v295 = vmul.f32 %v294, %v106
    %v296 = vadd.f32 %v295, 1e-05
    %v297 = vrsqrt.pop %v296
    %v298 = vmul.f32 %v297, %v296
    %v299 = vmul.f32 %v298, %v297
    %v300 = vmul.f32 0.5, %v299
    %v301 = vsub.f32 1.5, %v300
    %v302 = vmul.f32 %v297, %v301
    %vm303 = vweird.f32 %v296
    %vm304 = vweird.f32 %v297
    %vm305 = vmor %vm303, %vm304
    %v306 = vsel %vm305, %v297, %v302
    %v307 = vmul.f32 %v290, %v306
    %v308 = vperm.slane %v74, 0
    %v309 = vmul.f32 %v307, %v308
    %v310 = vperm.slane %v75, 0
    %v311 = vadd.f32 %v309, %v310
    %v312 = vperm.slane %v82, 0
    %v314 = vsel %vm96, %v311, 0
    %316 = vmatpush.msra.mxu0 0.0
    %317 = vmatpush.msra.mxu0 0.0
    %318 = vmatpush.msra.mxu0 0.0
    %319 = vmatpush.msra.mxu0 0.0
    %320 = vmatpush.msra.mxu0 0.0
    %321 = vmatpush.msra.mxu0 0.0
    %322 = vmatpush.msra.mxu0 0.0
    %323 = vmatpush.msra.mxu0 0.0
    %324 = vmatpush.msra.mxu0 0.0
    %325 = vmatpush.msra.mxu0 0.0
    %326 = vmatpush.msra.mxu0 %v81
    %327 = vmatpush.msra.mxu0 %v80
    %328 = vmatpush.msra.mxu0 %v79
    %329 = vmatpush.msra.mxu0 %v78
    %330 = vmatpush.msra.mxu0 %v77
    %331 = vmatpush.msra.mxu0 %v76
    %332 = vmatmul.f32.gmra.mxu0 %v314
    %v333 = vpop.f32.mrf.mxu0
    %v334 = vadd.f32 %v312, %v333
    %335 = vdwg.mxu0
    %v336 = vmul.f32 %v334, 0.5
    %v337 = vmul.f32 %v334, 0.044715
    %v338 = vmul.f32 %v337, %v334
    %v339 = vmul.f32 %v338, %v334
    %v340 = vadd.f32 %v334, %v339
    %v341 = vmul.f32 %v340, 0.7978846
    %v342 = vtanh.pop %v341
    %v343 = vadd.f32 %v342, 1.0
    %v344 = vmul.f32 %v336, %v343
    %v345 = vperm.slane %v95, 0
    %vm346 = vcmask 785408
    %v348 = vsel %vm346, %v344, 0
    %350 = vmatpush.msra.mxu0 0.0
    %351 = vmatpush.msra.mxu0 0.0
    %352 = vmatpush.msra.mxu0 0.0
    %353 = vmatpush.msra.mxu0 0.0
    %354 = vmatpush.msra.mxu0 %v94
    %355 = vmatpush.msra.mxu0 %v93
    %356 = vmatpush.msra.mxu0 %v92
    %357 = vmatpush.msra.mxu0 %v91
    %358 = vmatpush.msra.mxu0 %v90
    %359 = vmatpush.msra.mxu0 %v89
    %360 = vmatpush.msra.mxu0 %v88
    %361 = vmatpush.msra.mxu0 %v87
    %362 = vmatpush.msra.mxu0 %v86
    %363 = vmatpush.msra.mxu0 %v85
    %364 = vmatpush.msra.mxu0 %v84
    %365 = vmatpush.msra.mxu0 %v83
    %366 = vmatmul.f32.gmra.mxu0 %v348
    %v367 = vpop.f32.mrf.mxu0
    %v368 = vadd.f32 %v345, %v367
    %369 = vdwg.mxu0
    %v370 = vadd.f32 %v285, %v368
    %v371 = vld [vmem:[#allocation2 + $0x110] sm:$0x1]
    %v372 = vld [vmem:[#allocation2 + $0x118] sm:$0x1]
    %v373 = vld [vmem:[#allocation2 + $0x120] sm:$0xff]
    %v374 = vld [vmem:[#allocation2 + $0x128] sm:$0xff]
    %v375 = vld [vmem:[#allocation2 + $0x130] sm:$0xf]
    %v376 = vld [vmem:[#allocation2 + $0x138] sm:$0xf]
    %v377 = vld [vmem:[#allocation2 + $0x140] sm:$0x1]
    %v378 = vld [vmem:[#allocation2 + $0x148] sm:$0x1]
    %v379 = vld [vmem:[#allocation2 + $0x150] sm:$0xff]
    %v380 = vld [vmem:[#allocation2 + $0x158] sm:$0xff]
    %v381 = vld [vmem:[#allocation2 + $0x160] sm:$0xff]
    %v382 = vld [vmem:[#allocation2 + $0x168] sm:$0xff]
    %v383 = vld [vmem:[#allocation2 + $0x170] sm:$0xff]
    %v384 = vld [vmem:[#allocation2 + $0x178] sm:$0xff]
    %v385 = vld [vmem:[#allocation2 + $0x180] sm:$0x1]
    %v386 = vld [vmem:[#allocation2 + $0x188] sm:$0xff]
    %v387 = vld [vmem:[#allocation2 + $0x190] sm:$0xff]
    %v388 = vld [vmem:[#allocation2 + $0x198] sm:$0xff]
    %v389 = vld [vmem:[#allocation2 + $0x1a0] sm:$0xff]
    %v390 = vld [vmem:[#allocation2 + $0x1a8] sm:$0xff]
    %v391 = vld [vmem:[#allocation2 + $0x1b0] sm:$0xff]
    %v392 = vld [vmem:[#allocation2 + $0x1b8] sm:$0xff]
    %v393 = vld [vmem:[#allocation2 + $0x1c0] sm:$0xff]
    %v394 = vld [vmem:[#allocation2 + $0x1c8] sm:$0xff]
    %v395 = vld [vmem:[#allocation2 + $0x1d0] sm:$0xff]
    %v396 = vld [vmem:[#allocation2 + $0x1d8] sm:$0xff]
    %v397 = vld [vmem:[#allocation2 + $0x1e0] sm:$0xff]
    %v398 = vld [vmem:[#allocation2 + $0x1e8] sm:$0x1]
    %v399 = vsel %vm96, %v370, 0.0
    %400 = vadd.xlane.f32.xlu0 %v399
    %v401 = vpop.xlane.xlu0 %400
    %v402 = vmul.f32 %v401, %v106
    %v403 = vsub.f32 %v370, %v402
    %v404 = vmul.f32 %v403, %v403
    %v405 = vsel %vm96, %v404, 0.0
    %406 = vadd.xlane.f32.xlu0 %v405
    %v407 = vpop.xlane.xlu0 %406
    %v408 = vmul.f32 %v407, %v106
    %v409 = vadd.f32 %v408, 1e-05
    %v410 = vrsqrt.pop %v409
    %v411 = vmul.f32 %v410, %v409
    %v412 = vmul.f32 %v411, %v410
    %v413 = vmul.f32 0.5, %v412
    %v414 = vsub.f32 1.5, %v413
    %v415 = vmul.f32 %v410, %v414
    %vm416 = vweird.f32 %v409
    %vm417 = vweird.f32 %v410
    %vm418 = vmor %vm416, %vm417
    %v419 = vsel %vm418, %v410, %v415
    %v420 = vmul.f32 %v403, %v419
    %v421 = vperm.slane %v371, 0
    %v422 = vmul.f32 %v420, %v421
    %v423 = vperm.slane %v372, 0
    %v424 = vadd.f32 %v422, %v423
    %426 = vset.pattern.permute.xlu0 0
    %427 = vperm.xlu0 %426, %v373
    %v428 = vpop.permute.xlu0 %427
    %v430 = vperm.slane %v424, 0
    %v431 = vmul.f32 %v428, %v430
    %432 = vset.pattern.permute.xlu0 1
    %433 = vperm.xlu0 %432, %v373
    %v434 = vpop.permute.xlu0 %433
    %v436 = vperm.slane %v424, 1
    %v437 = vmul.f32 %v434, %v436
    %v438 = vadd.f32 %v431, %v437
    %439 = vset.pattern.permute.xlu0 2
    %440 = vperm.xlu0 %439, %v373
    %v441 = vpop.permute.xlu0 %440
    %v443 = vperm.slane %v424, 2
    %v444 = vmul.f32 %v441, %v443
    %v445 = vadd.f32 %v438, %v444
    %446 = vset.pattern.permute.xlu0 3
    %447 = vperm.xlu0 %446, %v373
    %v448 = vpop.permute.xlu0 %447
    %v450 = vperm.slane %v424, 3
    %v451 = vmul.f32 %v448, %v450
    %v452 = vadd.f32 %v445, %v451
    %454 = vset.pattern.permute.xlu0 0
    %455 = vperm.xlu0 %454, %v374
    %v456 = vpop.permute.xlu0 %455
    %v458 = vadd.f32 %v452, %v456
    %v459 = vmul.f32 %v458, 0.5
    %v460 = vmul.f32 %v458, 0.044715
    %v461 = vmul.f32 %v460, %v458
    %v462 = vmul.f32 %v461, %v458
    %v463 = vadd.f32 %v458, %v462
    %v464 = vmul.f32 %v463, 0.7978846
    %v465 = vtanh.pop %v464
    %v466 = vadd.f32 %v465, 1.0
    %v467 = vmul.f32 %v459, %v466
    %469 = vset.pattern.permute.xlu0 0
    %470 = vperm.xlu0 %469, %v375
    %v471 = vpop.permute.xlu0 %470
    %v473 = vperm.slane %v467, 0
    %v474 = vmul.f32 %v471, %v473
    %475 = vset.pattern.permute.xlu0 1
    %476 = vperm.xlu0 %475, %v375
    %v477 = vpop.permute.xlu0 %476
    %v479 = vperm.slane %v467, 1
    %v480 = vmul.f32 %v477, %v479
    %v481 = vadd.f32 %v474, %v480
    %482 = vset.pattern.permute.xlu0 2
    %483 = vperm.xlu0 %482, %v375
    %v484 = vpop.permute.xlu0 %483
    %v486 = vperm.slane %v467, 2
    %v487 = vmul.f32 %v484, %v486
    %v488 = vadd.f32 %v481, %v487
    %489 = vset.pattern.permute.xlu0 3
    %490 = vperm.xlu0 %489, %v375
    %v491 = vpop.permute.xlu0 %490
    %v493 = vperm.slane %v467, 3
    %v494 = vmul.f32 %v491, %v493
    %v495 = vadd.f32 %v488, %v494
    %496 = vset.pattern.permute.xlu0 4
    %497 = vperm.xlu0 %496, %v375
    %v498 = vpop.permute.xlu0 %497
    %v500 = vperm.slane %v467, 4
    %v501 = vmul.f32 %v498, %v500
    %v502 = vadd.f32 %v495, %v501
    %503 = vset.pattern.permute.xlu0 5
    %504 = vperm.xlu0 %503, %v375
    %v505 = vpop.permute.xlu0 %504
    %v507 = vperm.slane %v467, 5
    %v508 = vmul.f32 %v505, %v507
    %v509 = vadd.f32 %v502, %v508
    %510 = vset.pattern.permute.xlu0 6
    %511 = vperm.xlu0 %510, %v375
    %v512 = vpop.permute.xlu0 %511
    %v514 = vperm.slane %v467, 6
    %v515 = vmul.f32 %v512, %v514
    %v516 = vadd.f32 %v509, %v515
    %517 = vset.pattern.permute.xlu0 7
    %518 = vperm.xlu0 %517, %v375
    %v519 = vpop.permute.xlu0 %518
    %v521 = vperm.slane %v467, 7
    %v522 = vmul.f32 %v519, %v521
    %v523 = vadd.f32 %v516, %v522
    %525 = vset.pattern.permute.xlu0 0
    %526 = vperm.xlu0 %525, %v376
    %v527 = vpop.permute.xlu0 %526
    %v529 = vadd.f32 %v523, %v527
    %v530 = vperm.slane %v424, 4
    %v531 = vmul.f32 %v428, %v530
    %v532 = vperm.slane %v424, 5
    %v533 = vmul.f32 %v434, %v532
    %v534 = vadd.f32 %v531, %v533
    %v535 = vperm.slane %v424, 6
    %v536 = vmul.f32 %v441, %v535
    %v537 = vadd.f32 %v534, %v536
    %v538 = vperm.slane %v424, 7
    %v539 = vmul.f32 %v448, %v538
    %v540 = vadd.f32 %v537, %v539
    %v541 = vadd.f32 %v540, %v456
    %v542 = vmul.f32 %v541, 0.5
    %v543 = vmul.f32 %v541, 0.044715
    %v544 = vmul.f32 %v543, %v541
    %v545 = vmul.f32 %v544, %v541
    %v546 = vadd.f32 %v541, %v545
    %v547 = vmul.f32 %v546, 0.7978846
    %v548 = vtanh.pop %v547
    %v549 = vadd.f32 %v548, 1.0
    %v550 = vmul.f32 %v542, %v549
    %v551 = vperm.slane %v550, 0
    %v552 = vmul.f32 %v471, %v551
    %v553 = vperm.slane %v550, 1
    %v554 = vmul.f32 %v477, %v553
    %v555 = vadd.f32 %v552, %v554
    %v556 = vperm.slane %v550, 2
    %v557 = vmul.f32 %v484, %v556
    %v558 = vadd.f32 %v555, %v557
    %v559 = vperm.slane %v550, 3
    %v560 = vmul.f32 %v491, %v559
    %v561 = vadd.f32 %v558, %v560
    %v562 = vperm.slane %v550, 4
    %v563 = vmul.f32 %v498, %v562
    %v564 = vadd.f32 %v561, %v563
    %v565 = vperm.slane %v550, 5
    %v566 = vmul.f32 %v505, %v565
    %v567 = vadd.f32 %v564, %v566
    %v568 = vperm.slane %v550, 6
    %v569 = vmul.f32 %v512, %v568
    %v570 = vadd.f32 %v567, %v569
    %v571 = vperm.slane %v550, 7
    %v572 = vmul.f32 %v519, %v571
    %v573 = vadd.f32 %v570, %v572
    %v574 = vadd.f32 %v573, %v527
    %v576 = vrot.slane %v574, 4
    %v578 = vsel %vm283, %v529, %v576
    %v579 = vadd.f32 %v370, %v578
    %v580 = vsel %vm96, %v579, 0.0
    %581 = vadd.xlane.f32.xlu0 %v580
    %v582 = vpop.xlane.xlu0 %581
    %v583 = vmul.f32 %v582, %v106
    %v584 = vsub.f32 %v579, %v583
    %v585 = vmul.f32 %v584, %v584
    %v586 = vsel %vm96, %v585, 0.0
    %587 = vadd.xlane.f32.xlu0 %v586
    %v588 = vpop.xlane.xlu0 %587
    %v589 = vmul.f32 %v588, %v106
    %v590 = vadd.f32 %v589, 1e-05
    %v591 = vrsqrt.pop %v590
    %v592 = vmul.f32 %v591, %v590
    %v593 = vmul.f32 %v592, %v591
    %v594 = vmul.f32 0.5, %v593
    %v595 = vsub.f32 1.5, %v594
    %v596 = vmul.f32 %v591, %v595
    %vm597 = vweird.f32 %v590
    %vm598 = vweird.f32 %v591
    %vm599 = vmor %vm597, %vm598
    %v600 = vsel %vm599, %v591, %v596
    %v601 = vmul.f32 %v584, %v600
    %v602 = vperm.slane %v377, 0
    %v603 = vmul.f32 %v601, %v602
    %v604 = vperm.slane %v378, 0
    %v605 = vadd.f32 %v603, %v604
    %v606 = vperm.slane %v385, 0
    %v608 = vsel %vm96, %v605, 0
    %610 = vmatpush.msra.mxu0 0.0
    %611 = vmatpush.msra.mxu0 0.0
    %612 = vmatpush.msra.mxu0 0.0
    %613 = vmatpush.msra.mxu0 0.0
    %614 = vmatpush.msra.mxu0 0.0
    %615 = vmatpush.msra.mxu0 0.0
    %616 = vmatpush.msra.mxu0 0.0
    %617 = vmatpush.msra.mxu0 0.0
    %618 = vmatpush.msra.mxu0 0.0
    %619 = vmatpush.msra.mxu0 0.0
    %620 = vmatpush.msra.mxu0 %v384
    %621 = vmatpush.msra.mxu0 %v383
    %622 = vmatpush.msra.mxu0 %v382
    %623 = vmatpush.msra.mxu0 %v381
    %624 = vmatpush.msra.mxu0 %v380
    %625 = vmatpush.msra.mxu0 %v379
    %626 = vmatmul.f32.gmra.mxu0 %v608
    %v627 = vpop.f32.mrf.mxu0
    %v628 = vadd.f32 %v606, %v627
    %629 = vdwg.mxu0
    %v630 = vmul.f32 %v628, 0.5
    %v631 = vmul.f32 %v628, 0.044715
    %v632 = vmul.f32 %v631, %v628
    %v633 = vmul.f32 %v632, %v628
    %v634 = vadd.f32 %v628, %v633
    %v635 = vmul.f32 %v634, 0.7978846
    %v636 = vtanh.pop %v635
    %v637 = vadd.f32 %v636, 1.0
    %v638 = vmul.f32 %v630, %v637
    %v639 = vperm.slane %v398, 0
    %v641 = vsel %vm346, %v638, 0
    %643 = vmatpush.msra.mxu0 0.0
    %644 = vmatpush.msra.mxu0 0.0
    %645 = vmatpush.msra.mxu0 0.0
    %646 = vmatpush.msra.mxu0 0.0
    %647 = vmatpush.msra.mxu0 %v397
    %648 = vmatpush.msra.mxu0 %v396
    %649 = vmatpush.msra.mxu0 %v395
    %650 = vmatpush.msra.mxu0 %v394
    %651 = vmatpush.msra.mxu0 %v393
    %652 = vmatpush.msra.mxu0 %v392
    %653 = vmatpush.msra.mxu0 %v391
    %654 = vmatpush.msra.mxu0 %v390
    %655 = vmatpush.msra.mxu0 %v389
    %656 = vmatpush.msra.mxu0 %v388
    %657 = vmatpush.msra.mxu0 %v387
    %658 = vmatpush.msra.mxu0 %v386
    %659 = vmatmul.f32.gmra.mxu0 %v641
    %v660 = vpop.f32.mrf.mxu0
    %v661 = vadd.f32 %v639, %v660
    %662 = vdwg.mxu0
    %v663 = vadd.f32 %v579, %v661
    %v664 = vld [vmem:[#allocation2 + $0x20] sm:$0x1]
    %v665 = vperm.slane %v664, 0
    %v666 = vmul.f32 %v663, %v665
    %v667 = vsel %vm96, %v666, 0.0
    %668 = vadd.xlane.f32.xlu0 %v667
    %v669 = vpop.xlane.xlu0 %668
    %v670 = vld [vmem:[#allocation2 + $0x28] sm:$0x1]
    %v671 = vperm.slane %v670, 0
    %v672 = vadd.f32 %v669, %v671
    %v673 = vld [vmem:[%s1] sm:$0xff]
    %vm674 = vcmask 31744
    %v675 = vsel %vm674, %v673, 0.0
    %676 = vadd.xlane.f32.xlu0 %v675
    %v677 = vpop.xlane.xlu0 %676
    %vm678 = vcmp.gt.f32.partialorder %v677, 0.0
    %v679 = vsel %vm678, 1, 0
    %v680 = vcvt.s32.f32 %v679
    %v681 = vmax.f32 %v672, 0.0
    %v682 = vmul.f32 %v672, %v680
    %v683 = vsub.f32 %v681, %v682
    %v684 = vand.u32 2147483647, %v672
    %v685 = vsub.f32 0.0, %v684
    %v686 = vmul.f32 %v685, 1.442695
    %v687 = vpow.pop %v686
    %v688 = vadd.f32 %v687, 1.0
    %v689 = vlog2.pop %v688
    %v690 = vmul.f32 %v689, 0.6931472
    %v691 = vadd.f32 %v683, %v690
    %vm692 = vcmask 7168
    %v693 = vsel %vm692, %v691, 0.0
    %694 = vadd.xlane.f32.xlu0 %v693
    %v695 = vpop.xlane.xlu0 %694
    %v696 = vrot.slane %v695, 4
    %v697 = vadd.f32 %v695, %v696
    %v698 = vrot.slane %v697, 2
    %v699 = vadd.f32 %v697, %v698
    %v700 = vrot.slane %v699, 1
    %v701 = vadd.f32 %v699, %v700
    %s702 = vtos %v701
    %v703 = vstv %s702
    %v704 = vrcp.pop 8.0
    %v705 = vmul.f32 8.0, %v704
    %v706 = vsub.f32 1.0, %v705
    %v707 = vmul.f32 %v704, %v706
    %v708 = vadd.f32 %v704, %v707
    %vm709 = vweird.f32 %v704
    %v710 = vsel %vm709, %v704, %v708
    %v711 = vmul.f32 %v703, %v710
    %vm712 = vcmask 0
    %713 = vst.msk [vmem:[#allocation5] sm:$0x1] %vm712, %v711
    // Predicated region
    $region18: #{tpu_custom_call.1} parent=1 // pred_check
      _
    $region19: #{tpu_custom_call.1} parent=1 // pred_check_branch
      %715 = sbr.rel (0) target = $region21
    $region20: #{tpu_custom_call.1} parent=1 // pred_region
      %717 = vsyncadd [#allocation4], 0
      %s719 = sshll.u32 [#allocation5], 4
      %s720 = int_to_ptr.vmem [resolvable:$true] %s719
      %s721 = sshll.u32 %s3, 4
      %s722 = int_to_ptr.hbm [resolvable:$true] %s721
      %724 = dma.vmem_to_hbm [thread:$0]  %s720, 16, %s722, [#allocation4]
    $region21: #{tpu_custom_call.1} parent=1 // pred_fallthru
      _
    // Predicated region
    $region22: #{tpu_custom_call.1} parent=1 // pred_check
      _
    $region23: #{tpu_custom_call.1} parent=1 // pred_check_branch
      %726 = sbr.rel (0) target = $region25
    $region24: #{tpu_custom_call.1} parent=1 // pred_region
      %728 = dma.done [#allocation4], 16
    $region25: #{tpu_custom_call.1} parent=1 // pred_fallthru
      _
    %729 = vsyncpa [#allocation3], 1
    %730 = vsyncpa [#allocation4], 1

</llo_original>
